<compile_context>
chip_gen: v7x
topology: tpu7x:2x2x1
jax: 0.10.0
libtpu: 0.0.40
codegen_flags: <defaults>
</compile_context>

<pallas_src>
import jax
import jax.numpy as jnp
from jax.experimental import pallas as pl
from jax.experimental.pallas import tpu as pltpu

EPS = 1e-5
LANE = 128


def _round_up(v, m):
    return (v + m - 1) // m * m


def _pad_last(a, target):
    pad = target - a.shape[-1]
    if pad == 0:
        return a
    cfg = [(0, 0)] * (a.ndim - 1) + [(0, pad)]
    return jnp.pad(a, cfg)


def _vmem_limit_bytes():
    # Generation-aware VMEM limit: ~100 MiB on 128-MiB parts (v5e/v6e), ~48 MiB on v7x.
    try:
        cap = int(pltpu.get_tpu_info().vmem_capacity_bytes)
    except Exception:
        cap = 64 * 1024 * 1024          # conservative (v7x-like) fallback
    return int(min(max(cap - 16 * 1024 * 1024, 32 * 1024 * 1024), 100 * 1024 * 1024))


def _const_spec(a):
    zeros = (0,) * a.ndim
    return pl.BlockSpec(a.shape, lambda n, b, _z=zeros: _z)


def _pick_band(N, H, W, cin_p, cmid_p, cout_p, vmem_limit):
    """Largest band (divisor of H) whose estimated VMEM fits; prefer >=8 grid steps."""
    weight_bytes = 2 * (2 * (cin_p * (cmid_p + cout_p) + 9 * cmid_p * cmid_p
                             + cmid_p * cout_p) + 4 * (2 * cmid_p + cout_p))
    budget = max(vmem_limit // 2 - weight_bytes, 1 << 20)

    def est(b):
        rows = b * W
        halo = (b + 2) * W
        scratch = 4 * (b + 2) * (W + 2) * cmid_p + 2 * (b + 2) * W * 3 * cmid_p
        io = 2 * (halo * cin_p * 2 + 2 * rows * cout_p * 2 + 8 * cout_p * 4)
        live = 4 * rows * (4 * cmid_p + 2 * cout_p)
        return scratch + io + live

    divisors = [d for d in range(1, H + 1) if H % d == 0]
    fitting = [d for d in divisors if est(d) <= budget] or [1]
    band = max(fitting)
    # Prefer >= 8 total grid steps (pipeline depth + v7x dual-core balance) as long as
    # each step still feeds the MXU with a reasonable number of rows.
    for d in sorted(fitting, reverse=True):
        if N * (H // d) >= 8 and d * W >= 64:
            band = d
            break
    return band


# ---------------------------------------------------------------------------
# Pass 1: banded conv branch + residual + per-block BatchNorm statistics.
# ---------------------------------------------------------------------------
def branch_kernel(x_ref, wa_ref, b1_ref, w3_ref, b3_ref, w2_ref, b2_ref,
                  resid_ref, h3_ref, stats_ref,
                  h1pad_ref, col_ref):
    _, BH, W, _ = x_ref.shape            # BH = band + 2 (band rows + 1-row halo each side)
    Cmid_p = b1_ref.shape[-1]
    Cout_p = b2_ref.shape[-1]
    band = BH - 2
    rows = band * W

    b = pl.program_id(1)
    nb = pl.num_programs(1)

    x = x_ref[...].reshape(BH * W, x_ref.shape[-1])           # bf16, halo rows included

    # Fused [1x1 branch conv | 1x1 residual conv]: one bf16 MXU matmul with shared LHS.
    y = jnp.dot(x, wa_ref[...], preferred_element_type=jnp.float32)
    h1 = y[:, :Cmid_p] + b1_ref[...]                          # (BH*W, Cmid_p) f32
    resid = y[W:(band + 1) * W, Cmid_p:]                      # interior rows only, f32

    # padding=1 scratch (f32 so the kx-offset sublane slices stay unpacked):
    # write interior columns, zero only the 1-pixel border; the halo rows hold the
    # recomputed h1 of the neighbouring bands and are zeroed only at the image border.
    h1pad_ref[:, 1:W + 1, :] = h1.reshape(BH, W, Cmid_p)
    zcol = jnp.zeros((BH, 1, Cmid_p), jnp.float32)
    h1pad_ref[:, 0:1, :] = zcol
    h1pad_ref[:, W + 1:W + 2, :] = zcol
    zrow = jnp.zeros((1, W + 2, Cmid_p), jnp.float32)

    @pl.when(b == 0)
    def _():
        h1pad_ref[0:1, :, :] = zrow                           # image top border

    @pl.when(b == nb - 1)
    def _():
        h1pad_ref[band + 1:band + 2, :, :] = zrow             # image bottom border

    # Three kx-shifted copies packed along lane-aligned channel blocks (bf16 pack:
    # half the store traffic of the relayout copies).
    for kx in range(3):
        col_ref[:, :, kx * Cmid_p:(kx + 1) * Cmid_p] = (
            h1pad_ref[:, kx:kx + W, :].astype(jnp.bfloat16))

    # 3x3 conv: ky shift is a contiguous leading-dim offset on col_ref, each matmul has
    # K = 3*Cmid_p (bf16 operands, f32 accumulation initialized by the first dot).
    acc = jnp.dot(col_ref[0:band, :, :].reshape(rows, 3 * Cmid_p), w3_ref[0],
                  preferred_element_type=jnp.float32)
    for ky in range(1, 3):
        acc = acc + jnp.dot(col_ref[ky:ky + band, :, :].reshape(rows, 3 * Cmid_p),
                            w3_ref[ky], preferred_element_type=jnp.float32)

    h2 = jnp.maximum(acc + b3_ref[...], 0.0).astype(jnp.bfloat16)
    h3 = jnp.dot(h2, w2_ref[...], preferred_element_type=jnp.float32) + b2_ref[...]

    # Per-block partial BN statistics from the f32 values (before the bf16 downcast).
    stats_ref[0, 0:1, :] = jnp.sum(resid, axis=0, keepdims=True)
    stats_ref[0, 1:2, :] = jnp.sum(resid * resid, axis=0, keepdims=True)
    stats_ref[0, 2:3, :] = jnp.sum(h3, axis=0, keepdims=True)
    stats_ref[0, 3:4, :] = jnp.sum(h3 * h3, axis=0, keepdims=True)
    stats_ref[0, 4:5, :] = jnp.sum(resid * h3, axis=0, keepdims=True)
    stats_ref[0, 5:8, :] = jnp.zeros((3, Cout_p), jnp.float32)

    resid_ref[...] = resid.astype(jnp.bfloat16).reshape(1, rows, Cout_p)
    h3_ref[...] = h3.astype(jnp.bfloat16).reshape(1, rows, Cout_p)


# ---------------------------------------------------------------------------
# Pass 2: apply the folded double-BatchNorm affine, streamed over NHW tiles.
# ---------------------------------------------------------------------------
def apply_kernel(coef_ref, resid_ref, h3_ref, out_ref):
    r = resid_ref[...].astype(jnp.float32)
    h = h3_ref[...].astype(jnp.float32)
    out_ref[...] = r * coef_ref[0:1, :] + h * coef_ref[1:2, :] + coef_ref[2:3, :]


def resblock_forward(x_nhwc, params):
    N, H, W, Cin = x_nhwc.shape
    Cout = params["w_res"].shape[-1]
    Cmid = params["w1"].shape[-1]
    NHW = N * H * W

    Cin_p = _round_up(Cin, LANE)
    Cmid_p = _round_up(Cmid, LANE)
    Cout_p = _round_up(Cout, LANE)

    vmem_limit = _vmem_limit_bytes()
    band = _pick_band(N, H, W, Cin_p, Cmid_p, Cout_p, vmem_limit)
    nb = H // band

    # ---- lane-dense, bf16 weight preparation ----
    w1_p = _pad_last(jnp.pad(params["w1"], ((0, Cin_p - Cin), (0, 0))), Cmid_p)
    wres_p = _pad_last(jnp.pad(params["w_res"], ((0, Cin_p - Cin), (0, 0))), Cout_p)
    wa = jnp.concatenate([w1_p, wres_p], axis=1).astype(jnp.bfloat16)   # (Cin_p, Cmid_p+Cout_p)
    w3_p = jnp.pad(params["w3"], ((0, 0), (0, Cmid_p - Cmid), (0, Cmid_p - Cmid)))
    w3_blocks = w3_p.reshape(3, 3 * Cmid_p, Cmid_p).astype(jnp.bfloat16)  # grouped by ky
    w2 = _pad_last(jnp.pad(params["w2"], ((0, Cmid_p - Cmid), (0, 0))),
                   Cout_p).astype(jnp.bfloat16)
    b1 = _pad_last(params["b1"], Cmid_p).astype(jnp.float32)
    b3 = _pad_last(params["b3"], Cmid_p).astype(jnp.float32)
    b2 = _pad_last(params["b2"], Cout_p).astype(jnp.float32)

    # ---- banded x with a 1-row halo per band (zero rows at image top/bottom) ----
    x_p = _pad_last(x_nhwc, Cin_p).astype(jnp.bfloat16)                  # (N, H, W, Cin_p)
    x_rows = jnp.pad(x_p, ((0, 0), (1, 1), (0, 0), (0, 0)))              # (N, H+2, W, Cin_p)
    x_bands = jnp.stack([x_rows[:, i * band:i * band + band + 2] for i in range(nb)],
                        axis=1).reshape(N * nb, band + 2, W, Cin_p)

    flops1 = (2 * N * nb * (band + 2) * W * Cin_p * (Cmid_p + Cout_p)
              + 2 * NHW * (9 * Cmid_p * Cmid_p + Cmid_p * Cout_p))
    bytes1 = int(x_bands.size * 2 + (wa.size + w3_blocks.size + w2.size) * 2
                 + (b1.size + b3.size + b2.size) * 4
                 + 2 * NHW * Cout_p * 2 + N * nb * 8 * Cout_p * 4)

    resid, h3, stats = pl.pallas_call(
        branch_kernel,
        grid=(N, nb),
        in_specs=[
            pl.BlockSpec((1, band + 2, W, Cin_p), lambda n, b: (n * nb + b, 0, 0, 0)),
            _const_spec(wa),
            _const_spec(b1),
            _const_spec(w3_blocks),
            _const_spec(b3),
            _const_spec(w2),
            _const_spec(b2),
        ],
        out_specs=(
            pl.BlockSpec((1, band * W, Cout_p), lambda n, b: (n * nb + b, 0, 0)),
            pl.BlockSpec((1, band * W, Cout_p), lambda n, b: (n * nb + b, 0, 0)),
            pl.BlockSpec((1, 8, Cout_p), lambda n, b: (n * nb + b, 0, 0)),
        ),
        out_shape=(
            jax.ShapeDtypeStruct((N * nb, band * W, Cout_p), jnp.bfloat16),
            jax.ShapeDtypeStruct((N * nb, band * W, Cout_p), jnp.bfloat16),
            jax.ShapeDtypeStruct((N * nb, 8, Cout_p), jnp.float32),
        ),
        scratch_shapes=[
            pltpu.VMEM((band + 2, W + 2, Cmid_p), jnp.float32),      # padded h1 (f32)
            pltpu.VMEM((band + 2, W, 3 * Cmid_p), jnp.bfloat16),     # kx-shifted im2col pack
        ],
        compiler_params=pltpu.CompilerParams(
            dimension_semantics=("parallel", "parallel"),
            vmem_limit_bytes=vmem_limit),
        cost_estimate=pl.CostEstimate(
            flops=int(flops1), transcendentals=0, bytes_accessed=bytes1),
    )(x_bands, wa, b1, w3_blocks, b3, w2, b2)

    # ---- fold the two training-mode BatchNorms into one per-channel affine ----
    n = jnp.float32(NHW)
    s = jnp.sum(stats, axis=0)                          # (8, Cout_p)
    sum_r, ssq_r, sum_h, ssq_h, sum_rh = s[0], s[1], s[2], s[3], s[4]
    g1 = _pad_last(params["g1"], Cout_p).reshape(-1)
    be1 = _pad_last(params["be1"], Cout_p).reshape(-1)
    g2 = _pad_last(params["g2"], Cout_p).reshape(-1)
    be2 = _pad_last(params["be2"], Cout_p).reshape(-1)

    mu_h = sum_h / n
    var_h = ssq_h / n - mu_h * mu_h
    a1 = g1 * jax.lax.rsqrt(var_h + EPS)                # BN1:  h3n = a1*h3 + c1
    c1 = be1 - mu_h * a1

    mu_r = sum_r / n
    var_r = ssq_r / n - mu_r * mu_r
    cov_rh = sum_rh / n - mu_r * mu_h
    mu_s = mu_r + a1 * mu_h + c1                        # stats of s = resid + a1*h3 + c1
    var_s = var_r + a1 * a1 * var_h + 2.0 * a1 * cov_rh
    a2 = g2 * jax.lax.rsqrt(var_s + EPS)                # BN2:  out = a2*(s - mu_s) + be2

    coef = jnp.stack([a2, a1 * a2, a2 * (c1 - mu_s) + be2], axis=0)       # (3, Cout_p)
    coef = jnp.concatenate([coef, jnp.zeros((5, Cout_p), jnp.float32)], axis=0)

    # ---- pass 2: streamed normalize/apply over lane-dense flattened NHW rows ----
    resid_flat = resid.reshape(NHW, Cout_p)
    h3_flat = h3.reshape(NHW, Cout_p)
    tile = min(NHW, 2048)
    grid2 = pl.cdiv(NHW, tile)

    out_flat = pl.pallas_call(
        apply_kernel,
        grid=(grid2,),
        in_specs=[
            pl.BlockSpec((8, Cout_p), lambda i: (0, 0)),
            pl.BlockSpec((tile, Cout_p), lambda i: (i, 0)),
            pl.BlockSpec((tile, Cout_p), lambda i: (i, 0)),
        ],
        out_specs=pl.BlockSpec((tile, Cout_p), lambda i: (i, 0)),
        out_shape=jax.ShapeDtypeStruct((NHW, Cout_p), jnp.float32),
        compiler_params=pltpu.CompilerParams(
            dimension_semantics=("parallel",),
            vmem_limit_bytes=vmem_limit),
        cost_estimate=pl.CostEstimate(
            flops=4 * NHW * Cout_p, transcendentals=0,
            bytes_accessed=2 * NHW * Cout_p * 2 + NHW * Cout_p * 4 + 8 * Cout_p * 4),
    )(coef, resid_flat, h3_flat)

    return out_flat.reshape(N, H, W, Cout_p)[..., :Cout]


# ---------------------------------------------------------------------------
# Plain-JAX f32 reference (same math as the PyTorch module, different code path).
# ---------------------------------------------------------------------------
def ref_forward(x_nhwc, params):
    N, H, W, _ = x_nhwc.shape
    res = jnp.einsum("nhwc,cd->nhwd", x_nhwc, params["w_res"])
    h1 = jnp.einsum("nhwc,cd->nhwd", x_nhwc, params["w1"]) + params["b1"]
    h1p = jnp.pad(h1, ((0, 0), (1, 1), (1, 1), (0, 0)))
    acc = jnp.zeros((N, H, W, params["w1"].shape[-1]), jnp.float32)
    for ky in range(3):
        for kx in range(3):
            acc = acc + jnp.einsum("nhwc,cd->nhwd",
                                   h1p[:, ky:ky + H, kx:kx + W, :],
                                   params["w3"][ky * 3 + kx])
    acc = acc + params["b3"]
    h2 = jnp.maximum(acc, 0.0)
    h3 = jnp.einsum("nhwc,cd->nhwd", h2, params["w2"]) + params["b2"]

    def bn(t, g, b):
        mu = t.mean(axis=(0, 1, 2), keepdims=True)
        var = ((t - mu) ** 2).mean(axis=(0, 1, 2), keepdims=True)
        return (t - mu) * jax.lax.rsqrt(var + EPS) * g + b

    h3n = bn(h3, params["g1"], params["be1"])
    return bn(res + h3n, params["g2"], params["be2"])


def make_params(key, cin, cout, reduction=1):
    cmid = cout // reduction
    ks = jax.random.split(key, 6)
    scale = 0.2
    # Conv weights kept in kernel-friendly layout:
    #   PyTorch (Cout, Cin, 1, 1) -> (Cin, Cout)
    #   PyTorch (Cout, Cin, 3, 3) -> (9, Cin, Cout)  (tap-major, k = ky*3 + kx)
    return {
        "w_res": jax.random.normal(ks[0], (cin, cout), jnp.float32) * scale,
        "w1": jax.random.normal(ks[1], (cin, cmid), jnp.float32) * scale,
        "b1": jax.random.normal(ks[2], (1, cmid), jnp.float32) * scale,
        "w3": jax.random.normal(ks[3], (9, cmid, cmid), jnp.float32) * scale,
        "b3": jax.random.normal(ks[4], (1, cmid), jnp.float32) * scale,
        "w2": jax.random.normal(ks[5], (cmid, cout), jnp.float32) * scale,
        "b2": jnp.zeros((1, cout), jnp.float32),
        # BatchNorm2d defaults: weight=1, bias=0 (training-mode batch stats used)
        "g1": jnp.ones((1, cout), jnp.float32),
        "be1": jnp.zeros((1, cout), jnp.float32),
        "g2": jnp.ones((1, cout), jnp.float32),
        "be2": jnp.zeros((1, cout), jnp.float32),
    }


if __name__ == "__main__":
    N, Cin, Cout, H, W = 2, 4, 8, 16, 16
    key = jax.random.PRNGKey(0)
    kx_, kp_ = jax.random.split(key)

    x_nchw = jax.random.normal(kx_, (N, Cin, H, W), jnp.float32)  # PyTorch layout
    x_nhwc = jnp.transpose(x_nchw, (0, 2, 3, 1))                  # kernel layout

    params = make_params(kp_, Cin, Cout, reduction=1)

    out = resblock_forward(x_nhwc, params)
    out = jax.block_until_ready(out)

    ref = ref_forward(x_nhwc, params)
    assert out.shape == (N, H, W, Cout)
    # bf16 MXU operands / bf16 intermediates: tolerance relaxed vs. the old f32-only 1e-3.
    err = float(jnp.max(jnp.abs(out - ref)))
    assert err < 1e-1, f"mismatch vs reference: max abs err = {err}"

    print("KERNEL_OK")
</pallas_src>

<mosaic_0001>
module attributes {stable_mosaic.version = 11 : i64} {
  func.func @branch_kernel(%arg0: i32, %arg1: i32, %arg2: memref<1x6x16x128xbf16, #tpu.memory_space<vmem>>, %arg3: memref<128x256xbf16, #tpu.memory_space<vmem>>, %arg4: memref<1x128xf32, #tpu.memory_space<vmem>>, %arg5: memref<3x384x128xbf16, #tpu.memory_space<vmem>>, %arg6: memref<1x128xf32, #tpu.memory_space<vmem>>, %arg7: memref<128x128xbf16, #tpu.memory_space<vmem>>, %arg8: memref<1x128xf32, #tpu.memory_space<vmem>>, %arg9: memref<1x64x128xbf16, #tpu.memory_space<vmem>>, %arg10: memref<1x64x128xbf16, #tpu.memory_space<vmem>>, %arg11: memref<1x8x128xf32, #tpu.memory_space<vmem>>, %arg12: memref<6x18x128xf32, #tpu.memory_space<vmem>>, %arg13: memref<6x16x384xbf16, #tpu.memory_space<vmem>>) attributes {dimension_semantics = [#tpu.dimension_semantics<parallel>, #tpu.dimension_semantics<parallel>], iteration_bounds = array<i64: 2, 4>, scalar_prefetch = 0 : i64, scratch_operands = 2 : i64, tpu.core_type = #tpu.core_type<tc>, window_params = [{transform_indices = @transform_0, window_bounds = array<i64: 1, 6, 16, 128>}, {pipeline_mode = #tpu.pipeline_mode<synchronous>, transform_indices = @transform_1, window_bounds = array<i64: 128, 256>}, {pipeline_mode = #tpu.pipeline_mode<synchronous>, transform_indices = @transform_2, window_bounds = array<i64: 1, 128>}, {pipeline_mode = #tpu.pipeline_mode<synchronous>, transform_indices = @transform_3, window_bounds = array<i64: 3, 384, 128>}, {pipeline_mode = #tpu.pipeline_mode<synchronous>, transform_indices = @transform_4, window_bounds = array<i64: 1, 128>}, {pipeline_mode = #tpu.pipeline_mode<synchronous>, transform_indices = @transform_5, window_bounds = array<i64: 128, 128>}, {pipeline_mode = #tpu.pipeline_mode<synchronous>, transform_indices = @transform_6, window_bounds = array<i64: 1, 128>}, {transform_indices = @transform_7, window_bounds = array<i64: 1, 64, 128>}, {transform_indices = @transform_8, window_bounds = array<i64: 1, 64, 128>}, {transform_indices = @transform_9, window_bounds = array<i64: 1, 8, 128>}]} {
    %c0 = arith.constant 0 : index
    %c0_0 = arith.constant 0 : index
    %c0_1 = arith.constant 0 : index
    %c0_2 = arith.constant 0 : index
    %0 = vector.load %arg2[%c0, %c0_0, %c0_1, %c0_2] : memref<1x6x16x128xbf16, #tpu.memory_space<vmem>>, vector<1x6x16x128xbf16>
    %1 = vector.shape_cast %0 : vector<1x6x16x128xbf16> to vector<96x128xbf16>
    %c0_3 = arith.constant 0 : index
    %c0_4 = arith.constant 0 : index
    %2 = vector.load %arg3[%c0_3, %c0_4] : memref<128x256xbf16, #tpu.memory_space<vmem>>, vector<128x256xbf16>
    %cst = arith.constant dense<0.000000e+00> : vector<96x256xf32>
    %3 = tpu.matmul %1, %2, %cst {dimension_numbers = #tpu.dot_dimension_numbers<[1], [0], [0], [1], [0, 0, 1, 1], [], []>} : vector<96x128xbf16>, vector<128x256xbf16>, vector<96x256xf32> -> vector<96x256xf32>
    %4 = vector.extract_strided_slice %3 {offsets = [0, 0], sizes = [96, 128], strides = [1, 1]} : vector<96x256xf32> to vector<96x128xf32>
    %c0_5 = arith.constant 0 : index
    %c0_6 = arith.constant 0 : index
    %5 = vector.load %arg4[%c0_5, %c0_6] : memref<1x128xf32, #tpu.memory_space<vmem>>, vector<1x128xf32>
    %6 = vector.broadcast %5 : vector<1x128xf32> to vector<96x128xf32>
    %7 = arith.addf %4, %6 : vector<96x128xf32>
    %8 = vector.extract_strided_slice %3 {offsets = [16, 128], sizes = [64, 128], strides = [1, 1]} : vector<96x256xf32> to vector<64x128xf32>
    %9 = vector.shape_cast %7 : vector<96x128xf32> to vector<6x16x128xf32>
    %c0_7 = arith.constant 0 : index
    %c1 = arith.constant 1 : index
    %c0_8 = arith.constant 0 : index
    %10 = vector.load %arg12[%c0_7, %c1, %c0_8] : memref<6x18x128xf32, #tpu.memory_space<vmem>>, vector<6x16x128xf32>
    tpu.vector_store %arg12[%c0_7, %c1, %c0_8], %9 {strides = array<i32>} : memref<6x18x128xf32, #tpu.memory_space<vmem>>, vector<6x16x128xf32>,
    %cst_9 = arith.constant 0.000000e+00 : f32
    %11 = vector.broadcast %cst_9 : f32 to vector<6x1x128xf32>
    %c0_10 = arith.constant 0 : index
    %c0_11 = arith.constant 0 : index
    %c0_12 = arith.constant 0 : index
    %12 = vector.load %arg12[%c0_10, %c0_11, %c0_12] : memref<6x18x128xf32, #tpu.memory_space<vmem>>, vector<6x1x128xf32>
    tpu.vector_store %arg12[%c0_10, %c0_11, %c0_12], %11 {strides = array<i32>} : memref<6x18x128xf32, #tpu.memory_space<vmem>>, vector<6x1x128xf32>,
    %c0_13 = arith.constant 0 : index
    %c17 = arith.constant 17 : index
    %c0_14 = arith.constant 0 : index
    %13 = vector.load %arg12[%c0_13, %c17, %c0_14] : memref<6x18x128xf32, #tpu.memory_space<vmem>>, vector<6x1x128xf32>
    tpu.vector_store %arg12[%c0_13, %c17, %c0_14], %11 {strides = array<i32>} : memref<6x18x128xf32, #tpu.memory_space<vmem>>, vector<6x1x128xf32>,
    %cst_15 = arith.constant 0.000000e+00 : f32
    %14 = vector.broadcast %cst_15 : f32 to vector<1x18x128xf32>
    %c0_i32 = arith.constant 0 : i32
    %15 = arith.cmpi eq, %arg1, %c0_i32 : i32
    %16 = arith.extui %15 : i1 to i32
    %c0_i32_16 = arith.constant 0 : i32
    %17 = arith.cmpi ne, %16, %c0_i32_16 : i32
    scf.if %17 {
      %c0_89 = arith.constant 0 : index
      %c0_90 = arith.constant 0 : index
      %c0_91 = arith.constant 0 : index
      %96 = vector.load %arg12[%c0_89, %c0_90, %c0_91] : memref<6x18x128xf32, #tpu.memory_space<vmem>>, vector<1x18x128xf32>
      tpu.vector_store %arg12[%c0_89, %c0_90, %c0_91], %14 {strides = array<i32>} : memref<6x18x128xf32, #tpu.memory_space<vmem>>, vector<1x18x128xf32>,
    } else {
    }
    %c3_i32 = arith.constant 3 : i32
    %18 = arith.cmpi eq, %arg1, %c3_i32 : i32
    %19 = arith.extui %18 : i1 to i32
    %c0_i32_17 = arith.constant 0 : i32
    %20 = arith.cmpi ne, %19, %c0_i32_17 : i32
    scf.if %20 {
      %c5_89 = arith.constant 5 : index
      %c0_90 = arith.constant 0 : index
      %c0_91 = arith.constant 0 : index
      %96 = vector.load %arg12[%c5_89, %c0_90, %c0_91] : memref<6x18x128xf32, #tpu.memory_space<vmem>>, vector<1x18x128xf32>
      tpu.vector_store %arg12[%c5_89, %c0_90, %c0_91], %14 {strides = array<i32>} : memref<6x18x128xf32, #tpu.memory_space<vmem>>, vector<1x18x128xf32>,
    } else {
    }
    %c0_18 = arith.constant 0 : index
    %c0_19 = arith.constant 0 : index
    %c0_20 = arith.constant 0 : index
    %21 = vector.load %arg12[%c0_18, %c0_19, %c0_20] : memref<6x18x128xf32, #tpu.memory_space<vmem>>, vector<6x16x128xf32>
    %22 = arith.truncf %21 : vector<6x16x128xf32> to vector<6x16x128xbf16>
    %c0_21 = arith.constant 0 : index
    %c0_22 = arith.constant 0 : index
    %c0_23 = arith.constant 0 : index
    %23 = vector.load %arg13[%c0_21, %c0_22, %c0_23] : memref<6x16x384xbf16, #tpu.memory_space<vmem>>, vector<6x16x128xbf16>
    tpu.vector_store %arg13[%c0_21, %c0_22, %c0_23], %22 {strides = array<i32>} : memref<6x16x384xbf16, #tpu.memory_space<vmem>>, vector<6x16x128xbf16>,
    %c0_24 = arith.constant 0 : index
    %c1_25 = arith.constant 1 : index
    %c0_26 = arith.constant 0 : index
    %24 = vector.load %arg12[%c0_24, %c1_25, %c0_26] : memref<6x18x128xf32, #tpu.memory_space<vmem>>, vector<6x16x128xf32>
    %25 = arith.truncf %24 : vector<6x16x128xf32> to vector<6x16x128xbf16>
    %c0_27 = arith.constant 0 : index
    %c0_28 = arith.constant 0 : index
    %c128 = arith.constant 128 : index
    %26 = vector.load %arg13[%c0_27, %c0_28, %c128] : memref<6x16x384xbf16, #tpu.memory_space<vmem>>, vector<6x16x128xbf16>
    tpu.vector_store %arg13[%c0_27, %c0_28, %c128], %25 {strides = array<i32>} : memref<6x16x384xbf16, #tpu.memory_space<vmem>>, vector<6x16x128xbf16>,
    %c0_29 = arith.constant 0 : index
    %c2 = arith.constant 2 : index
    %c0_30 = arith.constant 0 : index
    %27 = vector.load %arg12[%c0_29, %c2, %c0_30] : memref<6x18x128xf32, #tpu.memory_space<vmem>>, vector<6x16x128xf32>
    %28 = arith.truncf %27 : vector<6x16x128xf32> to vector<6x16x128xbf16>
    %c0_31 = arith.constant 0 : index
    %c0_32 = arith.constant 0 : index
    %c256 = arith.constant 256 : index
    %29 = vector.load %arg13[%c0_31, %c0_32, %c256] : memref<6x16x384xbf16, #tpu.memory_space<vmem>>, vector<6x16x128xbf16>
    tpu.vector_store %arg13[%c0_31, %c0_32, %c256], %28 {strides = array<i32>} : memref<6x16x384xbf16, #tpu.memory_space<vmem>>, vector<6x16x128xbf16>,
    %c0_33 = arith.constant 0 : index
    %c0_34 = arith.constant 0 : index
    %c0_35 = arith.constant 0 : index
    %30 = vector.load %arg13[%c0_33, %c0_34, %c0_35] : memref<6x16x384xbf16, #tpu.memory_space<vmem>>, vector<4x16x384xbf16>
    %31 = vector.shape_cast %30 : vector<4x16x384xbf16> to vector<64x384xbf16>
    %c0_36 = arith.constant 0 : index
    %c0_37 = arith.constant 0 : index
    %c0_38 = arith.constant 0 : index
    %32 = vector.load %arg5[%c0_36, %c0_37, %c0_38] : memref<3x384x128xbf16, #tpu.memory_space<vmem>>, vector<1x384x128xbf16>
    %33 = vector.shape_cast %32 : vector<1x384x128xbf16> to vector<384x128xbf16>
    %cst_39 = arith.constant dense<0.000000e+00> : vector<64x128xf32>
    %34 = tpu.matmul %31, %33, %cst_39 {dimension_numbers = #tpu.dot_dimension_numbers<[1], [0], [0], [1], [0, 0, 1, 1], [], []>} : vector<64x384xbf16>, vector<384x128xbf16>, vector<64x128xf32> -> vector<64x128xf32>
    %c1_40 = arith.constant 1 : index
    %c0_41 = arith.constant 0 : index
    %c0_42 = arith.constant 0 : index
    %35 = vector.load %arg13[%c1_40, %c0_41, %c0_42] : memref<6x16x384xbf16, #tpu.memory_space<vmem>>, vector<4x16x384xbf16>
    %36 = vector.shape_cast %35 : vector<4x16x384xbf16> to vector<64x384xbf16>
    %c1_43 = arith.constant 1 : index
    %c0_44 = arith.constant 0 : index
    %c0_45 = arith.constant 0 : index
    %37 = vector.load %arg5[%c1_43, %c0_44, %c0_45] : memref<3x384x128xbf16, #tpu.memory_space<vmem>>, vector<1x384x128xbf16>
    %38 = vector.shape_cast %37 : vector<1x384x128xbf16> to vector<384x128xbf16>
    %cst_46 = arith.constant dense<0.000000e+00> : vector<64x128xf32>
    %39 = tpu.matmul %36, %38, %cst_46 {dimension_numbers = #tpu.dot_dimension_numbers<[1], [0], [0], [1], [0, 0, 1, 1], [], []>} : vector<64x384xbf16>, vector<384x128xbf16>, vector<64x128xf32> -> vector<64x128xf32>
    %40 = arith.addf %34, %39 : vector<64x128xf32>
    %c2_47 = arith.constant 2 : index
    %c0_48 = arith.constant 0 : index
    %c0_49 = arith.constant 0 : index
    %41 = vector.load %arg13[%c2_47, %c0_48, %c0_49] : memref<6x16x384xbf16, #tpu.memory_space<vmem>>, vector<4x16x384xbf16>
    %42 = vector.shape_cast %41 : vector<4x16x384xbf16> to vector<64x384xbf16>
    %c2_50 = arith.constant 2 : index
    %c0_51 = arith.constant 0 : index
    %c0_52 = arith.constant 0 : index
    %43 = vector.load %arg5[%c2_50, %c0_51, %c0_52] : memref<3x384x128xbf16, #tpu.memory_space<vmem>>, vector<1x384x128xbf16>
    %44 = vector.shape_cast %43 : vector<1x384x128xbf16> to vector<384x128xbf16>
    %cst_53 = arith.constant dense<0.000000e+00> : vector<64x128xf32>
    %45 = tpu.matmul %42, %44, %cst_53 {dimension_numbers = #tpu.dot_dimension_numbers<[1], [0], [0], [1], [0, 0, 1, 1], [], []>} : vector<64x384xbf16>, vector<384x128xbf16>, vector<64x128xf32> -> vector<64x128xf32>
    %46 = arith.addf %40, %45 : vector<64x128xf32>
    %c0_54 = arith.constant 0 : index
    %c0_55 = arith.constant 0 : index
    %47 = vector.load %arg6[%c0_54, %c0_55] : memref<1x128xf32, #tpu.memory_space<vmem>>, vector<1x128xf32>
    %48 = vector.broadcast %47 : vector<1x128xf32> to vector<64x128xf32>
    %49 = arith.addf %46, %48 : vector<64x128xf32>
    %cst_56 = arith.constant 0.000000e+00 : f32
    %50 = vector.broadcast %cst_56 : f32 to vector<64x128xf32>
    %51 = arith.maximumf %49, %50 : vector<64x128xf32>
    %52 = arith.truncf %51 : vector<64x128xf32> to vector<64x128xbf16>
    %c0_57 = arith.constant 0 : index
    %c0_58 = arith.constant 0 : index
    %53 = vector.load %arg7[%c0_57, %c0_58] : memref<128x128xbf16, #tpu.memory_space<vmem>>, vector<128x128xbf16>
    %cst_59 = arith.constant dense<0.000000e+00> : vector<64x128xf32>
    %54 = tpu.matmul %52, %53, %cst_59 {dimension_numbers = #tpu.dot_dimension_numbers<[1], [0], [0], [1], [0, 0, 1, 1], [], []>} : vector<64x128xbf16>, vector<128x128xbf16>, vector<64x128xf32> -> vector<64x128xf32>
    %c0_60 = arith.constant 0 : index
    %c0_61 = arith.constant 0 : index
    %55 = vector.load %arg8[%c0_60, %c0_61] : memref<1x128xf32, #tpu.memory_space<vmem>>, vector<1x128xf32>
    %56 = vector.broadcast %55 : vector<1x128xf32> to vector<64x128xf32>
    %57 = arith.addf %54, %56 : vector<64x128xf32>
    %cst_62 = arith.constant dense<0.000000e+00> : vector<128xf32>
    %58 = vector.multi_reduction <add>, %8, %cst_62 [0] : vector<64x128xf32> to vector<128xf32>
    %59 = vector.shape_cast %58 : vector<128xf32> to vector<1x128xf32>
    %c0_63 = arith.constant 0 : index
    %c0_64 = arith.constant 0 : index
    %c0_65 = arith.constant 0 : index
    %60 = vector.load %arg11[%c0_63, %c0_64, %c0_65] : memref<1x8x128xf32, #tpu.memory_space<vmem>>, vector<1x1x128xf32>
    %61 = vector.shape_cast %60 : vector<1x1x128xf32> to vector<1x128xf32>
    %62 = vector.shape_cast %59 : vector<1x128xf32> to vector<1x1x128xf32>
    tpu.vector_store %arg11[%c0_63, %c0_64, %c0_65], %62 {strides = array<i32>} : memref<1x8x128xf32, #tpu.memory_space<vmem>>, vector<1x1x128xf32>,
    %63 = arith.mulf %8, %8 : vector<64x128xf32>
    %cst_66 = arith.constant dense<0.000000e+00> : vector<128xf32>
    %64 = vector.multi_reduction <add>, %63, %cst_66 [0] : vector<64x128xf32> to vector<128xf32>
    %65 = vector.shape_cast %64 : vector<128xf32> to vector<1x128xf32>
    %c0_67 = arith.constant 0 : index
    %c1_68 = arith.constant 1 : index
    %c0_69 = arith.constant 0 : index
    %66 = vector.load %arg11[%c0_67, %c1_68, %c0_69] : memref<1x8x128xf32, #tpu.memory_space<vmem>>, vector<1x1x128xf32>
    %67 = vector.shape_cast %66 : vector<1x1x128xf32> to vector<1x128xf32>
    %68 = vector.shape_cast %65 : vector<1x128xf32> to vector<1x1x128xf32>
    tpu.vector_store %arg11[%c0_67, %c1_68, %c0_69], %68 {strides = array<i32>} : memref<1x8x128xf32, #tpu.memory_space<vmem>>, vector<1x1x128xf32>,
    %cst_70 = arith.constant dense<0.000000e+00> : vector<128xf32>
    %69 = vector.multi_reduction <add>, %57, %cst_70 [0] : vector<64x128xf32> to vector<128xf32>
    %70 = vector.shape_cast %69 : vector<128xf32> to vector<1x128xf32>
    %c0_71 = arith.constant 0 : index
    %c2_72 = arith.constant 2 : index
    %c0_73 = arith.constant 0 : index
    %71 = vector.load %arg11[%c0_71, %c2_72, %c0_73] : memref<1x8x128xf32, #tpu.memory_space<vmem>>, vector<1x1x128xf32>
    %72 = vector.shape_cast %71 : vector<1x1x128xf32> to vector<1x128xf32>
    %73 = vector.shape_cast %70 : vector<1x128xf32> to vector<1x1x128xf32>
    tpu.vector_store %arg11[%c0_71, %c2_72, %c0_73], %73 {strides = array<i32>} : memref<1x8x128xf32, #tpu.memory_space<vmem>>, vector<1x1x128xf32>,
    %74 = arith.mulf %57, %57 : vector<64x128xf32>
    %cst_74 = arith.constant dense<0.000000e+00> : vector<128xf32>
    %75 = vector.multi_reduction <add>, %74, %cst_74 [0] : vector<64x128xf32> to vector<128xf32>
    %76 = vector.shape_cast %75 : vector<128xf32> to vector<1x128xf32>
    %c0_75 = arith.constant 0 : index
    %c3 = arith.constant 3 : index
    %c0_76 = arith.constant 0 : index
    %77 = vector.load %arg11[%c0_75, %c3, %c0_76] : memref<1x8x128xf32, #tpu.memory_space<vmem>>, vector<1x1x128xf32>
    %78 = vector.shape_cast %77 : vector<1x1x128xf32> to vector<1x128xf32>
    %79 = vector.shape_cast %76 : vector<1x128xf32> to vector<1x1x128xf32>
    tpu.vector_store %arg11[%c0_75, %c3, %c0_76], %79 {strides = array<i32>} : memref<1x8x128xf32, #tpu.memory_space<vmem>>, vector<1x1x128xf32>,
    %80 = arith.mulf %8, %57 : vector<64x128xf32>
    %cst_77 = arith.constant dense<0.000000e+00> : vector<128xf32>
    %81 = vector.multi_reduction <add>, %80, %cst_77 [0] : vector<64x128xf32> to vector<128xf32>
    %82 = vector.shape_cast %81 : vector<128xf32> to vector<1x128xf32>
    %c0_78 = arith.constant 0 : index
    %c4 = arith.constant 4 : index
    %c0_79 = arith.constant 0 : index
    %83 = vector.load %arg11[%c0_78, %c4, %c0_79] : memref<1x8x128xf32, #tpu.memory_space<vmem>>, vector<1x1x128xf32>
    %84 = vector.shape_cast %83 : vector<1x1x128xf32> to vector<1x128xf32>
    %85 = vector.shape_cast %82 : vector<1x128xf32> to vector<1x1x128xf32>
    tpu.vector_store %arg11[%c0_78, %c4, %c0_79], %85 {strides = array<i32>} : memref<1x8x128xf32, #tpu.memory_space<vmem>>, vector<1x1x128xf32>,
    %cst_80 = arith.constant 0.000000e+00 : f32
    %86 = vector.broadcast %cst_80 : f32 to vector<3x128xf32>
    %c0_81 = arith.constant 0 : index
    %c5 = arith.constant 5 : index
    %c0_82 = arith.constant 0 : index
    %87 = vector.load %arg11[%c0_81, %c5, %c0_82] : memref<1x8x128xf32, #tpu.memory_space<vmem>>, vector<1x3x128xf32>
    %88 = vector.shape_cast %87 : vector<1x3x128xf32> to vector<3x128xf32>
    %89 = vector.shape_cast %86 : vector<3x128xf32> to vector<1x3x128xf32>
    tpu.vector_store %arg11[%c0_81, %c5, %c0_82], %89 {strides = array<i32>} : memref<1x8x128xf32, #tpu.memory_space<vmem>>, vector<1x3x128xf32>,
    %90 = arith.truncf %8 : vector<64x128xf32> to vector<64x128xbf16>
    %91 = vector.shape_cast %90 : vector<64x128xbf16> to vector<1x64x128xbf16>
    %c0_83 = arith.constant 0 : index
    %c0_84 = arith.constant 0 : index
    %c0_85 = arith.constant 0 : index
    %92 = vector.load %arg9[%c0_83, %c0_84, %c0_85] : memref<1x64x128xbf16, #tpu.memory_space<vmem>>, vector<1x64x128xbf16>
    tpu.vector_store %arg9[%c0_83, %c0_84, %c0_85], %91 {strides = array<i32>} : memref<1x64x128xbf16, #tpu.memory_space<vmem>>, vector<1x64x128xbf16>,
    %93 = arith.truncf %57 : vector<64x128xf32> to vector<64x128xbf16>
    %94 = vector.shape_cast %93 : vector<64x128xbf16> to vector<1x64x128xbf16>
    %c0_86 = arith.constant 0 : index
    %c0_87 = arith.constant 0 : index
    %c0_88 = arith.constant 0 : index
    %95 = vector.load %arg10[%c0_86, %c0_87, %c0_88] : memref<1x64x128xbf16, #tpu.memory_space<vmem>>, vector<1x64x128xbf16>
    tpu.vector_store %arg10[%c0_86, %c0_87, %c0_88], %94 {strides = array<i32>} : memref<1x64x128xbf16, #tpu.memory_space<vmem>>, vector<1x64x128xbf16>,
    return
  }
  func.func @transform_0(%arg0: i32, %arg1: i32) -> (i32, i32, i32, i32) {
    %c4_i32 = arith.constant 4 : i32
    %0 = arith.muli %arg0, %c4_i32 : i32
    %1 = arith.addi %0, %arg1 : i32
    %c0_i32 = arith.constant 0 : i32
    %c0_i32_0 = arith.constant 0 : i32
    %c0_i32_1 = arith.constant 0 : i32
    %c0_i32_2 = arith.constant 0 : i32
    return %1, %c0_i32, %c0_i32_0, %c0_i32_1 : i32, i32, i32, i32
  }
  func.func @transform_1(%arg0: i32, %arg1: i32) -> (i32, i32) {
    %c0_i32 = arith.constant 0 : i32
    %c0_i32_0 = arith.constant 0 : i32
    %c0_i32_1 = arith.constant 0 : i32
    return %c0_i32, %c0_i32_0 : i32, i32
  }
  func.func @transform_2(%arg0: i32, %arg1: i32) -> (i32, i32) {
    %c0_i32 = arith.constant 0 : i32
    %c0_i32_0 = arith.constant 0 : i32
    %c0_i32_1 = arith.constant 0 : i32
    return %c0_i32, %c0_i32_0 : i32, i32
  }
  func.func @transform_3(%arg0: i32, %arg1: i32) -> (i32, i32, i32) {
    %c0_i32 = arith.constant 0 : i32
    %c0_i32_0 = arith.constant 0 : i32
    %c0_i32_1 = arith.constant 0 : i32
    %c0_i32_2 = arith.constant 0 : i32
    return %c0_i32, %c0_i32_0, %c0_i32_1 : i32, i32, i32
  }
  func.func @transform_4(%arg0: i32, %arg1: i32) -> (i32, i32) {
    %c0_i32 = arith.constant 0 : i32
    %c0_i32_0 = arith.constant 0 : i32
    %c0_i32_1 = arith.constant 0 : i32
    return %c0_i32, %c0_i32_0 : i32, i32
  }
  func.func @transform_5(%arg0: i32, %arg1: i32) -> (i32, i32) {
    %c0_i32 = arith.constant 0 : i32
    %c0_i32_0 = arith.constant 0 : i32
    %c0_i32_1 = arith.constant 0 : i32
    return %c0_i32, %c0_i32_0 : i32, i32
  }
  func.func @transform_6(%arg0: i32, %arg1: i32) -> (i32, i32) {
    %c0_i32 = arith.constant 0 : i32
    %c0_i32_0 = arith.constant 0 : i32
    %c0_i32_1 = arith.constant 0 : i32
    return %c0_i32, %c0_i32_0 : i32, i32
  }
  func.func @transform_7(%arg0: i32, %arg1: i32) -> (i32, i32, i32) {
    %c4_i32 = arith.constant 4 : i32
    %0 = arith.muli %arg0, %c4_i32 : i32
    %1 = arith.addi %0, %arg1 : i32
    %c0_i32 = arith.constant 0 : i32
    %c0_i32_0 = arith.constant 0 : i32
    %c0_i32_1 = arith.constant 0 : i32
    return %1, %c0_i32, %c0_i32_0 : i32, i32, i32
  }
  func.func @transform_8(%arg0: i32, %arg1: i32) -> (i32, i32, i32) {
    %c4_i32 = arith.constant 4 : i32
    %0 = arith.muli %arg0, %c4_i32 : i32
    %1 = arith.addi %0, %arg1 : i32
    %c0_i32 = arith.constant 0 : i32
    %c0_i32_0 = arith.constant 0 : i32
    %c0_i32_1 = arith.constant 0 : i32
    return %1, %c0_i32, %c0_i32_0 : i32, i32, i32
  }
  func.func @transform_9(%arg0: i32, %arg1: i32) -> (i32, i32, i32) {
    %c4_i32 = arith.constant 4 : i32
    %0 = arith.muli %arg0, %c4_i32 : i32
    %1 = arith.addi %0, %arg1 : i32
    %c0_i32 = arith.constant 0 : i32
    %c0_i32_0 = arith.constant 0 : i32
    %c0_i32_1 = arith.constant 0 : i32
    return %1, %c0_i32, %c0_i32_0 : i32, i32, i32
  }
}

</mosaic_0001>

<llo_original>
// kernel: tpu_custom_call.1
$region0: #{tpu_custom_call.1}
  #allocation0 [shape = 'u32[]', space=smem, size = 0x4, offset = 0x4, fixed_abs, tag = 'smem constant byte address 0x4 - core index']
  #allocation1 [shape = 'u32[144,128]{1,0:T(1,128)}', space=vmem, size = 0x12000, scoped, tag = 'internal scratch']
  #allocation2 [shape = 'f32[6,18,128]{2,1,0:T(8,128)}', space=vmem, size = 0x12000, scoped, tag = 'scratch operand']
  #allocation3 [shape = 'bf16[6,16,384]{2,1,0:T(16,128)(2,1)}', space=vmem, size = 0x12000, scoped, tag = 'scratch operand']
  %s0 = inlined_call_operand.hbm [shape: bf16[8,6,16,128], index: 0, kind: input, shape index: {}]
  %s1 = inlined_call_operand.hbm [shape: bf16[128,256], index: 1, kind: input, shape index: {}]
  %s2 = inlined_call_operand.vmem [shape: f32[1,128], index: 2, kind: input, shape index: {}]
  %s3 = inlined_call_operand.hbm [shape: bf16[3,384,128], index: 3, kind: input, shape index: {}]
  %s4 = inlined_call_operand.vmem [shape: f32[1,128], index: 4, kind: input, shape index: {}]
  %s5 = inlined_call_operand.hbm [shape: bf16[128,128], index: 5, kind: input, shape index: {}]
  %s6 = inlined_call_operand.vmem [shape: f32[1,128], index: 6, kind: input, shape index: {}]
  %s7 = inlined_call_operand.hbm [shape: bf16[8,64,128], index: 7, kind: output, shape index: {0}]
  %s8 = inlined_call_operand.hbm [shape: bf16[8,64,128], index: 8, kind: output, shape index: {1}]
  %s9 = inlined_call_operand.hbm [shape: f32[8,8,128], index: 9, kind: output, shape index: {2}]
  %10 = xla_tuple %s7, %s8, %s9
  %s11 = sld [smem:[#allocation0]]
  $region101: #{tpu_custom_call.1} parent=0
    _
  %s13 = ssub.s32 1, %s11
  %s14 = scalar_select 0, %s13, %s11
  $region1: #{tpu_custom_call.1} parent=0
    #allocation4 [shape = 'u8[49152]{0}', space=vmem, size = 0xc000, scoped, tag = 'input window, operand 0']
    #allocation5 [shape = 's32[2]{0}', space=sflag, size = 0x8, scoped, tag = 'scoped memory for tpu_custom_call.1']
    #allocation6 [shape = 's32[2]{0}', space=sflag, size = 0x8, scoped, tag = 'scoped memory for tpu_custom_call.1']
    #allocation7 [shape = 'u8[65536]{0}', space=vmem, size = 0x10000, scoped, tag = 'input window, operand 1, single buffered']
    #allocation8 [shape = 's32[1]{0}', space=sflag, size = 0x4, scoped, tag = 'scoped memory for tpu_custom_call.1']
    #allocation9 [shape = 'u8[294912]{0}', space=vmem, size = 0x48000, scoped, tag = 'input window, operand 3, single buffered']
    #allocation10 [shape = 'u8[32768]{0}', space=vmem, size = 0x8000, scoped, tag = 'input window, operand 5, single buffered']
    #allocation11 [shape = 's32[1]{0}', space=sflag, size = 0x4, scoped, tag = 'scoped memory for tpu_custom_call.1']
    #allocation12 [shape = 'u8[32768]{0}', space=vmem, size = 0x8000, scoped, tag = 'output window, operand 0']
    #allocation13 [shape = 'u8[32768]{0}', space=vmem, size = 0x8000, scoped, tag = 'output window, operand 1']
    #allocation14 [shape = 's32[2]{0}', space=sflag, size = 0x8, scoped, tag = 'scoped memory for tpu_custom_call.1']
    #allocation15 [shape = 'u8[8192]{0}', space=vmem, size = 0x2000, scoped, tag = 'output window, operand 2']
    %15 = vsyncpa [#allocation5], 0
    %s16 = scalar_lea.sflag [#allocation5], 1
    %17 = vsyncpa %s16, 0
    %18 = vsyncpa [#allocation8], 0
    %19 = vsyncpa [#allocation11], 0
    %20 = vsyncpa [#allocation6], 0
    %s21 = scalar_lea.sflag [#allocation6], 1
    %22 = vsyncpa %s21, 0
    %23 = vsyncpa [#allocation14], 0
    %s24 = scalar_lea.sflag [#allocation14], 1
    %25 = vsyncpa %s24, 0
    loop: start=0, step=1, limit=10
    $region2: #{tpu_custom_call.1} parent=1 // loop_pre_header
      _
    $region3: #{tpu_custom_call.1} parent=1 // loop_header
      %s27 = sphi 0, %s31
      %p28 = scmp.ge.s32.totalorder %s27, 10
      %s34 = sphi 0, %s46
      %s35 = sphi 0, %s42
      %s36 = sphi 0, %s34
      %s37 = sphi 0, %s35
      %s38 = sphi 0, %s36
      %s39 = sphi 0, %s37
      %s53 = sphi 0, %s55
      %s56 = sphi 0, %s53
      %s57 = sphi 0, %s56
      %s73 = sphi 0, %s57
      %s77 = sphi 0, %s77
      %s79 = sphi 0, %s77
      %s80 = sphi 0, %s79
      %s94 = sphi 0, %s80
      %s98 = sphi 0, %s98
      %s100 = sphi 0, %s98
      %s101 = sphi 0, %s100
      %s115 = sphi 0, %s101
      %s119 = sphi 0, %s119
      %s121 = sphi 0, %s119
      %s122 = sphi 0, %s121
      %s136 = sphi 0, %s122
      %s140 = sphi 0, %s140
      %s142 = sphi 0, %s140
      %s143 = sphi 0, %s142
      %s157 = sphi 0, %s143
      %s161 = sphi 0, %s161
      %s163 = sphi 0, %s161
      %s164 = sphi 0, %s163
      %s178 = sphi 0, %s164
      %s182 = sphi 0, %s182
      %s184 = sphi 0, %s182
      %s185 = sphi 0, %s184
      %s199 = sphi 0, %s185
      %s209 = sphi 0, %s211
      %s212 = sphi 0, %s209
      %s213 = sphi 0, %s212
      %s229 = sphi 0, %s213
      %s239 = sphi 0, %s241
      %s242 = sphi 0, %s239
      %s243 = sphi 0, %s242
      %s259 = sphi 0, %s243
      %s269 = sphi 0, %s271
      %s272 = sphi 0, %s269
      %s273 = sphi 0, %s272
      %s289 = sphi 0, %s273
    $region4: #{tpu_custom_call.1} parent=1 // loop_header_branch
      %30 = sbr.rel (%p28) target = $region8
    $region5: #{tpu_custom_call.1} parent=1 // loop_body
      %s32 = ssub.s32 %s27, 1
      %s33 = ssub.s32 %s27, 2
      %s40 = sadd.s32 1, %s35
      %p41 = scmp.ge.s32.totalorder %s40, 4
      %s42 = scalar_select %p41, 0, %s40
      %s43 = sadd.s32 1, %s34
      %s44 = scalar_select %p41, %s43, %s34
      %p45 = scmp.ge.s32.totalorder %s44, 2
      %s46 = scalar_select %p45, 0, %s44
      %s47 = smul.u32 %s34, 4
      %s48 = sadd.s32 %s47, %s35
      %s49 = smul.u32 %s46, 4
      %s50 = sadd.s32 %s49, %s42
      %s51 = ssub.s32 %s48, %s50
      %p52 = scmp.eq.s32.totalorder %s51, 0
      %s54 = sadd.s32 %s53, 1
      %s55 = scalar_select %p52, %s53, %s54
      %p58 = pneg %p52
      %p59 = scmp.eq.s32.totalorder %s27, 7
      %p60 = por %p58, %p59
      %p61 = scmp.ne.s32.totalorder %s53, %s56
      %p62 = scmp.eq.s32.totalorder %s27, 0
      %p63 = por %p61, %p62
      %p64 = scmp.ne.s32.totalorder %s53, %s56
      %p65 = scmp.eq.s32.totalorder %s32, 7
      %p66 = por %p64, %p65
      %p67 = scmp.ne.s32.totalorder %s56, %s57
      %p68 = scmp.eq.s32.totalorder %s32, 0
      %p69 = por %p67, %p68
      %p70 = scmp.ne.s32.totalorder %s56, %s57
      %p71 = scmp.eq.s32.totalorder %s33, 7
      %p72 = por %p70, %p71
      %p74 = scmp.ne.s32.totalorder %s57, %s73
      %p75 = scmp.eq.s32.totalorder %s33, 0
      %p76 = por %p74, %p75
      %s78 = sadd.s32 %s77, 1
      %p81 = scmp.eq.s32.totalorder %s27, 7
      %p82 = scmp.ne.s32.totalorder %s77, %s79
      %p83 = scmp.eq.s32.totalorder %s27, 0
      %p84 = por %p82, %p83
      %p85 = scmp.ne.s32.totalorder %s77, %s79
      %p86 = scmp.eq.s32.totalorder %s32, 7
      %p87 = por %p85, %p86
      %p88 = scmp.ne.s32.totalorder %s79, %s80
      %p89 = scmp.eq.s32.totalorder %s32, 0
      %p90 = por %p88, %p89
      %p91 = scmp.ne.s32.totalorder %s79, %s80
      %p92 = scmp.eq.s32.totalorder %s33, 7
      %p93 = por %p91, %p92
      %p95 = scmp.ne.s32.totalorder %s80, %s94
      %p96 = scmp.eq.s32.totalorder %s33, 0
      %p97 = por %p95, %p96
      %s99 = sadd.s32 %s98, 1
      %p102 = scmp.eq.s32.totalorder %s27, 7
      %p103 = scmp.ne.s32.totalorder %s98, %s100
      %p104 = scmp.eq.s32.totalorder %s27, 0
      %p105 = por %p103, %p104
      %p106 = scmp.ne.s32.totalorder %s98, %s100
      %p107 = scmp.eq.s32.totalorder %s32, 7
      %p108 = por %p106, %p107
      %p109 = scmp.ne.s32.totalorder %s100, %s101
      %p110 = scmp.eq.s32.totalorder %s32, 0
      %p111 = por %p109, %p110
      %p112 = scmp.ne.s32.totalorder %s100, %s101
      %p113 = scmp.eq.s32.totalorder %s33, 7
      %p114 = por %p112, %p113
      %p116 = scmp.ne.s32.totalorder %s101, %s115
      %p117 = scmp.eq.s32.totalorder %s33, 0
      %p118 = por %p116, %p117
      %s120 = sadd.s32 %s119, 1
      %p123 = scmp.eq.s32.totalorder %s27, 7
      %p124 = scmp.ne.s32.totalorder %s119, %s121
      %p125 = scmp.eq.s32.totalorder %s27, 0
      %p126 = por %p124, %p125
      %p127 = scmp.ne.s32.totalorder %s119, %s121
      %p128 = scmp.eq.s32.totalorder %s32, 7
      %p129 = por %p127, %p128
      %p130 = scmp.ne.s32.totalorder %s121, %s122
      %p131 = scmp.eq.s32.totalorder %s32, 0
      %p132 = por %p130, %p131
      %p133 = scmp.ne.s32.totalorder %s121, %s122
      %p134 = scmp.eq.s32.totalorder %s33, 7
      %p135 = por %p133, %p134
      %p137 = scmp.ne.s32.totalorder %s122, %s136
      %p138 = scmp.eq.s32.totalorder %s33, 0
      %p139 = por %p137, %p138
      %s141 = sadd.s32 %s140, 1
      %p144 = scmp.eq.s32.totalorder %s27, 7
      %p145 = scmp.ne.s32.totalorder %s140, %s142
      %p146 = scmp.eq.s32.totalorder %s27, 0
      %p147 = por %p145, %p146
      %p148 = scmp.ne.s32.totalorder %s140, %s142
      %p149 = scmp.eq.s32.totalorder %s32, 7
      %p150 = por %p148, %p149
      %p151 = scmp.ne.s32.totalorder %s142, %s143
      %p152 = scmp.eq.s32.totalorder %s32, 0
      %p153 = por %p151, %p152
      %p154 = scmp.ne.s32.totalorder %s142, %s143
      %p155 = scmp.eq.s32.totalorder %s33, 7
      %p156 = por %p154, %p155
      %p158 = scmp.ne.s32.totalorder %s143, %s157
      %p159 = scmp.eq.s32.totalorder %s33, 0
      %p160 = por %p158, %p159
      %s162 = sadd.s32 %s161, 1
      %p165 = scmp.eq.s32.totalorder %s27, 7
      %p166 = scmp.ne.s32.totalorder %s161, %s163
      %p167 = scmp.eq.s32.totalorder %s27, 0
      %p168 = por %p166, %p167
      %p169 = scmp.ne.s32.totalorder %s161, %s163
      %p170 = scmp.eq.s32.totalorder %s32, 7
      %p171 = por %p169, %p170
      %p172 = scmp.ne.s32.totalorder %s163, %s164
      %p173 = scmp.eq.s32.totalorder %s32, 0
      %p174 = por %p172, %p173
      %p175 = scmp.ne.s32.totalorder %s163, %s164
      %p176 = scmp.eq.s32.totalorder %s33, 7
      %p177 = por %p175, %p176
      %p179 = scmp.ne.s32.totalorder %s164, %s178
      %p180 = scmp.eq.s32.totalorder %s33, 0
      %p181 = por %p179, %p180
      %s183 = sadd.s32 %s182, 1
      %p186 = scmp.eq.s32.totalorder %s27, 7
      %p187 = scmp.ne.s32.totalorder %s182, %s184
      %p188 = scmp.eq.s32.totalorder %s27, 0
      %p189 = por %p187, %p188
      %p190 = scmp.ne.s32.totalorder %s182, %s184
      %p191 = scmp.eq.s32.totalorder %s32, 7
      %p192 = por %p190, %p191
      %p193 = scmp.ne.s32.totalorder %s184, %s185
      %p194 = scmp.eq.s32.totalorder %s32, 0
      %p195 = por %p193, %p194
      %p196 = scmp.ne.s32.totalorder %s184, %s185
      %p197 = scmp.eq.s32.totalorder %s33, 7
      %p198 = por %p196, %p197
      %p200 = scmp.ne.s32.totalorder %s185, %s199
      %p201 = scmp.eq.s32.totalorder %s33, 0
      %p202 = por %p200, %p201
      %s203 = smul.u32 %s34, 4
      %s204 = sadd.s32 %s203, %s35
      %s205 = smul.u32 %s46, 4
      %s206 = sadd.s32 %s205, %s42
      %s207 = ssub.s32 %s204, %s206
      %p208 = scmp.eq.s32.totalorder %s207, 0
      %s210 = sadd.s32 %s209, 1
      %s211 = scalar_select %p208, %s209, %s210
      %p214 = pneg %p208
      %p215 = scmp.eq.s32.totalorder %s27, 7
      %p216 = por %p214, %p215
      %p217 = scmp.ne.s32.totalorder %s209, %s212
      %p218 = scmp.eq.s32.totalorder %s27, 0
      %p219 = por %p217, %p218
      %p220 = scmp.ne.s32.totalorder %s209, %s212
      %p221 = scmp.eq.s32.totalorder %s32, 7
      %p222 = por %p220, %p221
      %p223 = scmp.ne.s32.totalorder %s212, %s213
      %p224 = scmp.eq.s32.totalorder %s32, 0
      %p225 = por %p223, %p224
      %p226 = scmp.ne.s32.totalorder %s212, %s213
      %p227 = scmp.eq.s32.totalorder %s33, 7
      %p228 = por %p226, %p227
      %p230 = scmp.ne.s32.totalorder %s213, %s229
      %p231 = scmp.eq.s32.totalorder %s33, 0
      %p232 = por %p230, %p231
      %s233 = smul.u32 %s34, 4
      %s234 = sadd.s32 %s233, %s35
      %s235 = smul.u32 %s46, 4
      %s236 = sadd.s32 %s235, %s42
      %s237 = ssub.s32 %s234, %s236
      %p238 = scmp.eq.s32.totalorder %s237, 0
      %s240 = sadd.s32 %s239, 1
      %s241 = scalar_select %p238, %s239, %s240
      %p244 = pneg %p238
      %p245 = scmp.eq.s32.totalorder %s27, 7
      %p246 = por %p244, %p245
      %p247 = scmp.ne.s32.totalorder %s239, %s242
      %p248 = scmp.eq.s32.totalorder %s27, 0
      %p249 = por %p247, %p248
      %p250 = scmp.ne.s32.totalorder %s239, %s242
      %p251 = scmp.eq.s32.totalorder %s32, 7
      %p252 = por %p250, %p251
      %p253 = scmp.ne.s32.totalorder %s242, %s243
      %p254 = scmp.eq.s32.totalorder %s32, 0
      %p255 = por %p253, %p254
      %p256 = scmp.ne.s32.totalorder %s242, %s243
      %p257 = scmp.eq.s32.totalorder %s33, 7
      %p258 = por %p256, %p257
      %p260 = scmp.ne.s32.totalorder %s243, %s259
      %p261 = scmp.eq.s32.totalorder %s33, 0
      %p262 = por %p260, %p261
      %s263 = smul.u32 %s34, 4
      %s264 = sadd.s32 %s263, %s35
      %s265 = smul.u32 %s46, 4
      %s266 = sadd.s32 %s265, %s42
      %s267 = ssub.s32 %s264, %s266
      %p268 = scmp.eq.s32.totalorder %s267, 0
      %s270 = sadd.s32 %s269, 1
      %s271 = scalar_select %p268, %s269, %s270
      %p274 = pneg %p268
      %p275 = scmp.eq.s32.totalorder %s27, 7
      %p276 = por %p274, %p275
      %p277 = scmp.ne.s32.totalorder %s269, %s272
      %p278 = scmp.eq.s32.totalorder %s27, 0
      %p279 = por %p277, %p278
      %p280 = scmp.ne.s32.totalorder %s269, %s272
      %p281 = scmp.eq.s32.totalorder %s32, 7
      %p282 = por %p280, %p281
      %p283 = scmp.ne.s32.totalorder %s272, %s273
      %p284 = scmp.eq.s32.totalorder %s32, 0
      %p285 = por %p283, %p284
      %p286 = scmp.ne.s32.totalorder %s272, %s273
      %p287 = scmp.eq.s32.totalorder %s33, 7
      %p288 = por %p286, %p287
      %p290 = scmp.ne.s32.totalorder %s273, %s289
      %p291 = scmp.eq.s32.totalorder %s33, 0
      %p292 = por %p290, %p291
      %p293 = scmp.le.s32.totalorder 1, %s27
      %p294 = scmp.lt.s32.totalorder %s27, 9
      %p295 = pnand %p293, %p294
      %p296 = pneg %p295
      // Predicated region
      $region9: #{tpu_custom_call.1} parent=5 // pred_check
        _
      $region10: #{tpu_custom_call.1} parent=5 // pred_check_branch
        %298 = sbr.rel (%p295) target = $region12
      $region11: #{tpu_custom_call.1} parent=5 // pred_region
        %s299 = ssub.s32 %s27, 1
        // Predicated region
        $region13: #{tpu_custom_call.1} parent=11 // pred_check
          %p300 = pneg %p90
        $region14: #{tpu_custom_call.1} parent=11 // pred_check_branch
          %302 = sbr.rel (%p300) target = $region16
        $region15: #{tpu_custom_call.1} parent=11 // pred_region
          %s304 = ssub.s32 2048, 2048
          %305 = vsyncadd [#allocation8], %s304
          %s306 = sshll.u32 [#allocation7], 4
          %s307 = int_to_ptr.vmem [resolvable:$true] %s306
          %312 = dma.hbm_to_vmem [thread:$0]  %s1, 2048, %s307, [#allocation8], 128, 128, 8
        $region16: #{tpu_custom_call.1} parent=11 // pred_fallthru
          _
        // Predicated region
        $region17: #{tpu_custom_call.1} parent=11 // pred_check
          %p313 = pneg %p111
        $region18: #{tpu_custom_call.1} parent=11 // pred_check_branch
          %315 = sbr.rel (%p313) target = $region20
        $region19: #{tpu_custom_call.1} parent=11 // pred_region
          _
        $region20: #{tpu_custom_call.1} parent=11 // pred_fallthru
          _
        // Predicated region
        $region21: #{tpu_custom_call.1} parent=11 // pred_check
          %p316 = pneg %p132
        $region22: #{tpu_custom_call.1} parent=11 // pred_check_branch
          %318 = sbr.rel (%p316) target = $region24
        $region23: #{tpu_custom_call.1} parent=11 // pred_region
          %s320 = ssub.s32 9216, 9216
          %321 = vsyncadd [#allocation8], %s320
          %s322 = sshll.u32 [#allocation9], 4
          %s323 = int_to_ptr.vmem [resolvable:$true] %s322
          %328 = dma.hbm_to_vmem [thread:$0]  %s3, 9216, %s323, [#allocation8], 64, 64, 4
        $region24: #{tpu_custom_call.1} parent=11 // pred_fallthru
          _
        // Predicated region
        $region25: #{tpu_custom_call.1} parent=11 // pred_check
          %p329 = pneg %p153
        $region26: #{tpu_custom_call.1} parent=11 // pred_check_branch
          %331 = sbr.rel (%p329) target = $region28
        $region27: #{tpu_custom_call.1} parent=11 // pred_region
          _
        $region28: #{tpu_custom_call.1} parent=11 // pred_fallthru
          _
        // Predicated region
        $region29: #{tpu_custom_call.1} parent=11 // pred_check
          %p332 = pneg %p174
        $region30: #{tpu_custom_call.1} parent=11 // pred_check_branch
          %334 = sbr.rel (%p332) target = $region32
        $region31: #{tpu_custom_call.1} parent=11 // pred_region
          %s336 = ssub.s32 1024, 1024
          %337 = vsyncadd [#allocation11], %s336
          %s338 = sshll.u32 [#allocation10], 4
          %s339 = int_to_ptr.vmem [resolvable:$true] %s338
          %344 = dma.hbm_to_vmem [thread:$0]  %s5, 1024, %s339, [#allocation11], 64, 64, 4
        $region32: #{tpu_custom_call.1} parent=11 // pred_fallthru
          _
        // Predicated region
        $region33: #{tpu_custom_call.1} parent=11 // pred_check
          %p345 = pneg %p195
        $region34: #{tpu_custom_call.1} parent=11 // pred_check_branch
          %347 = sbr.rel (%p345) target = $region36
        $region35: #{tpu_custom_call.1} parent=11 // pred_region
          _
        $region36: #{tpu_custom_call.1} parent=11 // pred_fallthru
          _
      $region12: #{tpu_custom_call.1} parent=5 // pred_fallthru
        _
      %p348 = scmp.lt.s32.totalorder %s27, 8
      // Predicated region
      $region37: #{tpu_custom_call.1} parent=5 // pred_check
        %p349 = pneg %p348
      $region38: #{tpu_custom_call.1} parent=5 // pred_check_branch
        %351 = sbr.rel (%p349) target = $region40
      $region39: #{tpu_custom_call.1} parent=5 // pred_region
        // Predicated region
        $region41: #{tpu_custom_call.1} parent=39 // pred_check
          %p352 = pneg %p63
        $region42: #{tpu_custom_call.1} parent=39 // pred_check_branch
          %354 = sbr.rel (%p352) target = $region44
        $region43: #{tpu_custom_call.1} parent=39 // pred_region
          %s355 = sand.u32 %s53, 1
          %s356 = scalar_lea.sflag [#allocation5], %s355
          %s357 = sand.u32 %s53, 1
          %s358 = smul.addr %s357, 48
          %s359 = scalar_lea.vmem [#allocation4], %s358
          %s360 = smul.u32 %s34, 4
          %s361 = sadd.s32 %s360, %s35
          %s363 = ssub.s32 768, 768
          %364 = vsyncadd %s356, %s363
          %s365 = smul.addr %s361, 12
          %s366 = smul.addr %s365, 64
          %s367 = scalar_lea.hbm %s0, %s366
          %s368 = sshll.u32 %s359, 4
          %s369 = int_to_ptr.vmem [resolvable:$true] %s368
          %374 = dma.hbm_to_vmem [thread:$0]  %s367, 768, %s369, %s356, 64, 64, 4
        $region44: #{tpu_custom_call.1} parent=39 // pred_fallthru
          _
      $region40: #{tpu_custom_call.1} parent=5 // pred_fallthru
        _
      %p375 = scmp.le.s32.totalorder 1, %s27
      %p376 = scmp.lt.s32.totalorder %s27, 9
      %p377 = pnand %p375, %p376
      %p378 = pneg %p377
      // Predicated region
      $region45: #{tpu_custom_call.1} parent=5 // pred_check
        _
      $region46: #{tpu_custom_call.1} parent=5 // pred_check_branch
        %380 = sbr.rel (%p377) target = $region48
      $region47: #{tpu_custom_call.1} parent=5 // pred_region
        %s381 = ssub.s32 %s27, 1
        %s382 = sand.u32 %s56, 1
        %s383 = scalar_lea.sflag [#allocation5], %s382
        %s384 = sand.u32 %s56, 1
        %s385 = smul.addr %s384, 48
        %s386 = scalar_lea.vmem [#allocation4], %s385
        // Predicated region
        $region49: #{tpu_custom_call.1} parent=47 // pred_check
          %p387 = pneg %p69
        $region50: #{tpu_custom_call.1} parent=47 // pred_check_branch
          %389 = sbr.rel (%p387) target = $region52
        $region51: #{tpu_custom_call.1} parent=47 // pred_region
          %390 = dma.done %s383, 768
        $region52: #{tpu_custom_call.1} parent=47 // pred_fallthru
          _
        // Predicated region
        $region53: #{tpu_custom_call.1} parent=47 // pred_check
          %p391 = pneg %p90
        $region54: #{tpu_custom_call.1} parent=47 // pred_check_branch
          %393 = sbr.rel (%p391) target = $region56
        $region55: #{tpu_custom_call.1} parent=47 // pred_region
          %394 = dma.done [#allocation8], 2048
        $region56: #{tpu_custom_call.1} parent=47 // pred_fallthru
          _
        // Predicated region
        $region57: #{tpu_custom_call.1} parent=47 // pred_check
          %p395 = pneg %p132
        $region58: #{tpu_custom_call.1} parent=47 // pred_check_branch
          %397 = sbr.rel (%p395) target = $region60
        $region59: #{tpu_custom_call.1} parent=47 // pred_region
          %398 = dma.done [#allocation8], 9216
        $region60: #{tpu_custom_call.1} parent=47 // pred_fallthru
          _
        // Predicated region
        $region61: #{tpu_custom_call.1} parent=47 // pred_check
          %p399 = pneg %p174
        $region62: #{tpu_custom_call.1} parent=47 // pred_check_branch
          %401 = sbr.rel (%p399) target = $region64
        $region63: #{tpu_custom_call.1} parent=47 // pred_region
          %402 = dma.done [#allocation11], 1024
        $region64: #{tpu_custom_call.1} parent=47 // pred_fallthru
          _
        %s403 = sand.u32 %s56, 1
        %s404 = scalar_lea.sflag [#allocation5], %s403
        %s405 = sand.u32 %s56, 1
        %s406 = smul.addr %s405, 48
        %s407 = scalar_lea.vmem [#allocation4], %s406
        %p408 = pneg %p69
        %p409 = pneg %p66
        %p410 = pneg %p90
        %p411 = pneg %p87
        %p412 = pneg %p111
        %p413 = pneg %p108
        %p414 = pneg %p132
        %p415 = pneg %p129
        %p416 = pneg %p153
        %p417 = pneg %p150
        %p418 = pneg %p174
        %p419 = pneg %p171
        %p420 = pneg %p195
        %p421 = pneg %p192
        %p422 = pneg %p225
        %p423 = pneg %p222
        %s424 = sand.u32 %s212, 1
        %s425 = scalar_lea.sflag [#allocation6], %s424
        %s426 = sand.u32 %s212, 1
        %s427 = smul.addr %s426, 32
        %s428 = scalar_lea.vmem [#allocation12], %s427
        %p429 = pneg %p255
        %p430 = pneg %p252
        %s431 = sand.u32 %s32, 1
        %s432 = scalar_lea.sflag [#allocation14], %s431
        %s433 = sand.u32 %s242, 1
        %s434 = smul.addr %s433, 32
        %s435 = scalar_lea.vmem [#allocation13], %s434
        %p436 = pneg %p285
        %p437 = pneg %p282
        %s438 = sand.u32 %s32, 1
        %s439 = scalar_lea.sflag [#allocation14], %s438
        %s440 = sand.u32 %s272, 1
        %s441 = smul.addr %s440, 8
        %s442 = scalar_lea.vmem [#allocation15], %s441
        %s443 = smul.u32 %s36, 4
        %s444 = sadd.s32 %s443, %s37
        %s445 = smul.u32 %s36, 4
        %s446 = sadd.s32 %s445, %s37
        %s447 = smul.u32 %s36, 4
        %s448 = sadd.s32 %s447, %s37
        %s449 = smul.u32 %s36, 4
        %s450 = sadd.s32 %s449, %s37
        %v452 = vld [vmem:[%s386] sm:$0xf]
        %v453 = vld [vmem:[%s386 + $0x4] sm:$0xf]
        %v454 = vld [vmem:[%s386 + $0x8] sm:$0xf]
        %v455 = vld [vmem:[%s386 + $0xc] sm:$0xf]
        %v456 = vld [vmem:[%s386 + $0x10] sm:$0xf]
        %v457 = vld [vmem:[%s386 + $0x14] sm:$0xf]
        %v458 = vld [vmem:[%s386 + $0x18] sm:$0xf]
        %v459 = vld [vmem:[%s386 + $0x1c] sm:$0xf]
        %v460 = vld [vmem:[%s386 + $0x20] sm:$0xf]
        %v461 = vld [vmem:[%s386 + $0x24] sm:$0xf]
        %v462 = vld [vmem:[%s386 + $0x28] sm:$0xf]
        %v463 = vld [vmem:[%s386 + $0x2c] sm:$0xf]
        %v464 = vld [vmem:[#allocation7] sm:$0xff]
        %v465 = vld [vmem:[#allocation7 + $0x8] sm:$0xff]
        %v466 = vld [vmem:[#allocation7 + $0x10] sm:$0xff]
        %v467 = vld [vmem:[#allocation7 + $0x18] sm:$0xff]
        %v468 = vld [vmem:[#allocation7 + $0x20] sm:$0xff]
        %v469 = vld [vmem:[#allocation7 + $0x28] sm:$0xff]
        %v470 = vld [vmem:[#allocation7 + $0x30] sm:$0xff]
        %v471 = vld [vmem:[#allocation7 + $0x38] sm:$0xff]
        %v472 = vld [vmem:[#allocation7 + $0x40] sm:$0xff]
        %v473 = vld [vmem:[#allocation7 + $0x48] sm:$0xff]
        %v474 = vld [vmem:[#allocation7 + $0x50] sm:$0xff]
        %v475 = vld [vmem:[#allocation7 + $0x58] sm:$0xff]
        %v476 = vld [vmem:[#allocation7 + $0x60] sm:$0xff]
        %v477 = vld [vmem:[#allocation7 + $0x68] sm:$0xff]
        %v478 = vld [vmem:[#allocation7 + $0x70] sm:$0xff]
        %v479 = vld [vmem:[#allocation7 + $0x78] sm:$0xff]
        %v492 = vunpack.c.l.b16 %v452
        %v493 = vunpack.c.l.b16 %v453
        %v494 = vunpack.c.l.b16 %v454
        %v495 = vunpack.c.l.b16 %v455
        %v496 = vunpack.c.l.b16 %v456
        %v497 = vunpack.c.l.b16 %v457
        %v498 = vunpack.c.l.b16 %v458
        %v499 = vunpack.c.l.b16 %v459
        %v500 = vunpack.c.l.b16 %v460
        %v501 = vunpack.c.l.b16 %v461
        %v502 = vunpack.c.l.b16 %v462
        %v503 = vunpack.c.l.b16 %v463
        %v504 = vpack.c.b16 %v493, %v492
        %v505 = vpack.c.b16 %v495, %v494
        %v506 = vpack.c.b16 %v497, %v496
        %v507 = vpack.c.b16 %v499, %v498
        %v508 = vpack.c.b16 %v501, %v500
        %v509 = vpack.c.b16 %v503, %v502
        %v532 = vunpack.c.l.b16 %v464
        %v533 = vunpack.c.h.b16 %v464
        %v534 = vunpack.c.l.b16 %v465
        %v535 = vunpack.c.h.b16 %v465
        %v536 = vunpack.c.l.b16 %v466
        %v537 = vunpack.c.h.b16 %v466
        %v538 = vunpack.c.l.b16 %v467
        %v539 = vunpack.c.h.b16 %v467
        %v540 = vunpack.c.l.b16 %v468
        %v541 = vunpack.c.h.b16 %v468
        %v542 = vunpack.c.l.b16 %v469
        %v543 = vunpack.c.h.b16 %v469
        %v544 = vunpack.c.l.b16 %v470
        %v545 = vunpack.c.h.b16 %v470
        %v546 = vunpack.c.l.b16 %v471
        %v547 = vunpack.c.h.b16 %v471
        %v548 = vunpack.c.l.b16 %v472
        %v549 = vunpack.c.h.b16 %v472
        %v550 = vunpack.c.l.b16 %v473
        %v551 = vunpack.c.h.b16 %v473
        %v552 = vunpack.c.l.b16 %v474
        %v553 = vunpack.c.h.b16 %v474
        %v554 = vunpack.c.l.b16 %v475
        %v555 = vunpack.c.h.b16 %v475
        %v556 = vunpack.c.l.b16 %v476
        %v557 = vunpack.c.h.b16 %v476
        %v558 = vunpack.c.l.b16 %v477
        %v559 = vunpack.c.h.b16 %v477
        %v560 = vunpack.c.l.b16 %v478
        %v561 = vunpack.c.h.b16 %v478
        %v562 = vunpack.c.l.b16 %v479
        %v563 = vunpack.c.h.b16 %v479
        %v564 = vpack.c.b16 %v534, %v532
        %v565 = vpack.c.b16 %v535, %v533
        %v566 = vpack.c.b16 %v538, %v536
        %v567 = vpack.c.b16 %v539, %v537
        %v568 = vpack.c.b16 %v542, %v540
        %v569 = vpack.c.b16 %v543, %v541
        %v570 = vpack.c.b16 %v546, %v544
        %v571 = vpack.c.b16 %v547, %v545
        %v572 = vpack.c.b16 %v550, %v548
        %v573 = vpack.c.b16 %v551, %v549
        %v574 = vpack.c.b16 %v554, %v552
        %v575 = vpack.c.b16 %v555, %v553
        %v576 = vpack.c.b16 %v558, %v556
        %v577 = vpack.c.b16 %v559, %v557
        %v578 = vpack.c.b16 %v562, %v560
        %v579 = vpack.c.b16 %v563, %v561
        %596 = vmatprep.subr.bf16.mxu0 %v565
        %597 = vmatpush1.bf16.msra.mxu0 %v564
        %598 = vmatprep.subr.bf16.mxu0 %v567
        %599 = vmatpush1.bf16.msra.mxu0 %v566
        %600 = vmatprep.subr.bf16.mxu0 %v569
        %601 = vmatpush1.bf16.msra.mxu0 %v568
        %602 = vmatprep.subr.bf16.mxu0 %v571
        %603 = vmatpush1.bf16.msra.mxu0 %v570
        %604 = vmatprep.subr.bf16.mxu0 %v573
        %605 = vmatpush1.bf16.msra.mxu0 %v572
        %606 = vmatprep.subr.bf16.mxu0 %v575
        %607 = vmatpush1.bf16.msra.mxu0 %v574
        %608 = vmatprep.subr.bf16.mxu0 %v577
        %609 = vmatpush1.bf16.msra.mxu0 %v576
        %610 = vmatprep.subr.bf16.mxu0 %v579
        %611 = vmatpush1.bf16.msra.mxu0 %v578
        %612 = vmatprep.subr.bf16.mxu0 0
        %613 = vmatpush1.bf16.msra.mxu0 0
        %614 = vmatprep.subr.bf16.mxu0 0
        %615 = vmatpush1.bf16.msra.mxu0 0
        %616 = vmatprep.subr.bf16.mxu0 0
        %617 = vmatpush1.bf16.msra.mxu0 0
        %618 = vmatprep.subr.bf16.mxu0 0
        %619 = vmatpush1.bf16.msra.mxu0 0
        %620 = vmatprep.subr.bf16.mxu0 0
        %621 = vmatpush1.bf16.msra.mxu0 0
        %622 = vmatprep.subr.bf16.mxu0 0
        %623 = vmatpush1.bf16.msra.mxu0 0
        %624 = vmatprep.subr.bf16.mxu0 0
        %625 = vmatpush1.bf16.msra.mxu0 0
        %626 = vmatprep.subr.bf16.mxu0 0
        %627 = vmatpush1.bf16.msra.mxu0 0
        %628 = vmatprep.mubr.bf16.mxu0 0
        %629 = vmatmul.mubr.bf16.gmra.mrb[0].mxu0 %v504
        %v630 = vpop.f32.mrb[0].mxu0
        %v631 = vadd.f32 0.0, %v630
        %v632 = vpop.f32.mrb[0].mxu0
        %v633 = vpop.f32.mrb[0].mxu0
        %v634 = vadd.f32 0.0, %v633
        %v635 = vpop.f32.mrb[0].mxu0
        %636 = vmatprep.mubr.bf16.mxu0 0
        %637 = vmatmul.mubr.bf16.gmra.mrb[0].mxu0 %v505
        %v638 = vpop.f32.mrb[0].mxu0
        %v639 = vadd.f32 0.0, %v638
        %v640 = vpop.f32.mrb[0].mxu0
        %v641 = vadd.f32 0.0, %v640
        %v642 = vpop.f32.mrb[0].mxu0
        %v643 = vadd.f32 0.0, %v642
        %v644 = vpop.f32.mrb[0].mxu0
        %v645 = vadd.f32 0.0, %v644
        %646 = vmatprep.mubr.bf16.mxu0 0
        %647 = vmatmul.mubr.bf16.gmra.mrb[0].mxu0 %v506
        %v648 = vpop.f32.mrb[0].mxu0
        %v649 = vadd.f32 0.0, %v648
        %v650 = vpop.f32.mrb[0].mxu0
        %v651 = vadd.f32 0.0, %v650
        %v652 = vpop.f32.mrb[0].mxu0
        %v653 = vadd.f32 0.0, %v652
        %v654 = vpop.f32.mrb[0].mxu0
        %v655 = vadd.f32 0.0, %v654
        %656 = vmatprep.mubr.bf16.mxu0 0
        %657 = vmatmul.mubr.bf16.gmra.mrb[0].mxu0 %v507
        %v658 = vpop.f32.mrb[0].mxu0
        %v659 = vadd.f32 0.0, %v658
        %v660 = vpop.f32.mrb[0].mxu0
        %v661 = vadd.f32 0.0, %v660
        %v662 = vpop.f32.mrb[0].mxu0
        %v663 = vadd.f32 0.0, %v662
        %v664 = vpop.f32.mrb[0].mxu0
        %v665 = vadd.f32 0.0, %v664
        %666 = vmatprep.mubr.bf16.mxu0 0
        %667 = vmatmul.mubr.bf16.gmra.mrb[0].mxu0 %v508
        %v668 = vpop.f32.mrb[0].mxu0
        %v669 = vadd.f32 0.0, %v668
        %v670 = vpop.f32.mrb[0].mxu0
        %v671 = vadd.f32 0.0, %v670
        %v672 = vpop.f32.mrb[0].mxu0
        %v673 = vadd.f32 0.0, %v672
        %v674 = vpop.f32.mrb[0].mxu0
        %v675 = vadd.f32 0.0, %v674
        %676 = vmatprep.mubr.bf16.mxu0 0
        %677 = vmatmul.mubr.bf16.gmra.mrb[0].mxu0 %v509
        %v678 = vpop.f32.mrb[0].mxu0
        %v679 = vadd.f32 0.0, %v678
        %v680 = vpop.f32.mrb[0].mxu0
        %v681 = vpop.f32.mrb[0].mxu0
        %v682 = vadd.f32 0.0, %v681
        %v683 = vpop.f32.mrb[0].mxu0
        %684 = vdwg.mxu0
        %v685 = vld [vmem:[%s2] sm:$0x1]
        %v687 = vlaneseq
        %v688 = vshrl.u32 %v687, 7
        %v689 = vsub.s32 0, %v688
        %v690 = vrot.slane %v685, %v689
        %v692 = vadd.f32 %v631, %v690
        %v693 = vadd.f32 %v634, %v690
        %v694 = vadd.f32 %v639, %v690
        %v695 = vadd.f32 %v643, %v690
        %v696 = vadd.f32 %v649, %v690
        %v697 = vadd.f32 %v653, %v690
        %v698 = vadd.f32 %v659, %v690
        %v699 = vadd.f32 %v663, %v690
        %v700 = vadd.f32 %v669, %v690
        %v701 = vadd.f32 %v673, %v690
        %v702 = vadd.f32 %v679, %v690
        %v703 = vadd.f32 %v682, %v690
        %704 = vst [vmem:[#allocation2 + $0x1] sm:$0xff] %v692
        %705 = vst [vmem:[#allocation2 + $0x9] sm:$0xff] %v693
        %706 = vst [vmem:[#allocation2 + $0x19] sm:$0xff] %v694
        %707 = vst [vmem:[#allocation2 + $0x21] sm:$0xff] %v695
        %708 = vst [vmem:[#allocation2 + $0x31] sm:$0xff] %v696
        %709 = vst [vmem:[#allocation2 + $0x39] sm:$0xff] %v697
        %710 = vst [vmem:[#allocation2 + $0x49] sm:$0xff] %v698
        %711 = vst [vmem:[#allocation2 + $0x51] sm:$0xff] %v699
        %712 = vst [vmem:[#allocation2 + $0x61] sm:$0xff] %v700
        %713 = vst [vmem:[#allocation2 + $0x69] sm:$0xff] %v701
        %714 = vst [vmem:[#allocation2 + $0x79] sm:$0xff] %v702
        %715 = vst [vmem:[#allocation2 + $0x81] sm:$0xff] %v703
        %716 = vst [vmem:[#allocation2] sm:$0x1] 0.0
        %717 = vst [vmem:[#allocation2 + $0x18] sm:$0x1] 0.0
        %718 = vst [vmem:[#allocation2 + $0x30] sm:$0x1] 0.0
        %719 = vst [vmem:[#allocation2 + $0x48] sm:$0x1] 0.0
        %720 = vst [vmem:[#allocation2 + $0x60] sm:$0x1] 0.0
        %721 = vst [vmem:[#allocation2 + $0x78] sm:$0x1] 0.0
        %722 = vst [vmem:[#allocation2 + $0x11] sm:$0x1] 0.0
        %723 = vst [vmem:[#allocation2 + $0x29] sm:$0x1] 0.0
        %724 = vst [vmem:[#allocation2 + $0x41] sm:$0x1] 0.0
        %725 = vst [vmem:[#allocation2 + $0x59] sm:$0x1] 0.0
        %726 = vst [vmem:[#allocation2 + $0x71] sm:$0x1] 0.0
        %727 = vst [vmem:[#allocation2 + $0x89] sm:$0x1] 0.0
        %p728 = scmp.eq.s32.totalorder %s37, 0
        // Predicated region
        $region65: #{tpu_custom_call.1} parent=47 // pred_check
          %p729 = pneg %p728
        $region66: #{tpu_custom_call.1} parent=47 // pred_check_branch
          %731 = sbr.rel (%p729) target = $region68
        $region67: #{tpu_custom_call.1} parent=47 // pred_region
          %732 = vst [vmem:[#allocation2] sm:$0xff] 0.0
          %733 = vst [vmem:[#allocation2 + $0x8] sm:$0xff] 0.0
          %734 = vst [vmem:[#allocation2 + $0x10] sm:$0x3] 0.0
        $region68: #{tpu_custom_call.1} parent=47 // pred_fallthru
          _
        %p735 = scmp.eq.s32.totalorder %s37, 3
        // Predicated region
        $region69: #{tpu_custom_call.1} parent=47 // pred_check
          %p736 = pneg %p735
        $region70: #{tpu_custom_call.1} parent=47 // pred_check_branch
          %738 = sbr.rel (%p736) target = $region72
        $region71: #{tpu_custom_call.1} parent=47 // pred_region
          %s739 = scalar_lea.vmem [#allocation2], 120
          %740 = vst [vmem:[%s739] sm:$0xff] 0.0
          %741 = vst [vmem:[%s739 + $0x8] sm:$0xff] 0.0
          %742 = vst [vmem:[%s739 + $0x10] sm:$0x3] 0.0
        $region72: #{tpu_custom_call.1} parent=47 // pred_fallthru
          _
        %v743 = vld [vmem:[#allocation2] sm:$0xff]
        %v744 = vld [vmem:[#allocation2 + $0x8] sm:$0xff]
        %v745 = vld [vmem:[#allocation2 + $0x18] sm:$0xff]
        %v746 = vld [vmem:[#allocation2 + $0x20] sm:$0xff]
        %v747 = vld [vmem:[#allocation2 + $0x30] sm:$0xff]
        %v748 = vld [vmem:[#allocation2 + $0x38] sm:$0xff]
        %v749 = vld [vmem:[#allocation2 + $0x48] sm:$0xff]
        %v750 = vld [vmem:[#allocation2 + $0x50] sm:$0xff]
        %v751 = vld [vmem:[#allocation2 + $0x60] sm:$0xff]
        %v752 = vld [vmem:[#allocation2 + $0x68] sm:$0xff]
        %v753 = vld [vmem:[#allocation2 + $0x78] sm:$0xff]
        %v754 = vld [vmem:[#allocation2 + $0x80] sm:$0xff]
        %v755 = vpack.c.bf16 %v744, %v743
        %v756 = vpack.c.bf16 %v746, %v745
        %v757 = vpack.c.bf16 %v748, %v747
        %v758 = vpack.c.bf16 %v750, %v749
        %v759 = vpack.c.bf16 %v752, %v751
        %v760 = vpack.c.bf16 %v754, %v753
        %761 = vst [vmem:[#allocation3] sm:$0xff] %v755
        %762 = vst [vmem:[#allocation3 + $0x18] sm:$0xff] %v756
        %763 = vst [vmem:[#allocation3 + $0x30] sm:$0xff] %v757
        %764 = vst [vmem:[#allocation3 + $0x48] sm:$0xff] %v758
        %765 = vst [vmem:[#allocation3 + $0x60] sm:$0xff] %v759
        %766 = vst [vmem:[#allocation3 + $0x78] sm:$0xff] %v760
        %v767 = vld [vmem:[#allocation2 + $0x1] sm:$0xff]
        %v768 = vld [vmem:[#allocation2 + $0x9] sm:$0xff]
        %v769 = vld [vmem:[#allocation2 + $0x19] sm:$0xff]
        %v770 = vld [vmem:[#allocation2 + $0x21] sm:$0xff]
        %v771 = vld [vmem:[#allocation2 + $0x31] sm:$0xff]
        %v772 = vld [vmem:[#allocation2 + $0x39] sm:$0xff]
        %v773 = vld [vmem:[#allocation2 + $0x49] sm:$0xff]
        %v774 = vld [vmem:[#allocation2 + $0x51] sm:$0xff]
        %v775 = vld [vmem:[#allocation2 + $0x61] sm:$0xff]
        %v776 = vld [vmem:[#allocation2 + $0x69] sm:$0xff]
        %v777 = vld [vmem:[#allocation2 + $0x79] sm:$0xff]
        %v778 = vld [vmem:[#allocation2 + $0x81] sm:$0xff]
        %v779 = vpack.c.bf16 %v768, %v767
        %v780 = vpack.c.bf16 %v770, %v769
        %v781 = vpack.c.bf16 %v772, %v771
        %v782 = vpack.c.bf16 %v774, %v773
        %v783 = vpack.c.bf16 %v776, %v775
        %v784 = vpack.c.bf16 %v778, %v777
        %785 = vst [vmem:[#allocation3 + $0x8] sm:$0xff] %v779
        %786 = vst [vmem:[#allocation3 + $0x20] sm:$0xff] %v780
        %787 = vst [vmem:[#allocation3 + $0x38] sm:$0xff] %v781
        %788 = vst [vmem:[#allocation3 + $0x50] sm:$0xff] %v782
        %789 = vst [vmem:[#allocation3 + $0x68] sm:$0xff] %v783
        %790 = vst [vmem:[#allocation3 + $0x80] sm:$0xff] %v784
        %v791 = vld [vmem:[#allocation2 + $0x2] sm:$0xff]
        %v792 = vld [vmem:[#allocation2 + $0xa] sm:$0xff]
        %v793 = vld [vmem:[#allocation2 + $0x1a] sm:$0xff]
        %v794 = vld [vmem:[#allocation2 + $0x22] sm:$0xff]
        %v795 = vld [vmem:[#allocation2 + $0x32] sm:$0xff]
        %v796 = vld [vmem:[#allocation2 + $0x3a] sm:$0xff]
        %v797 = vld [vmem:[#allocation2 + $0x4a] sm:$0xff]
        %v798 = vld [vmem:[#allocation2 + $0x52] sm:$0xff]
        %v799 = vld [vmem:[#allocation2 + $0x62] sm:$0xff]
        %v800 = vld [vmem:[#allocation2 + $0x6a] sm:$0xff]
        %v801 = vld [vmem:[#allocation2 + $0x7a] sm:$0xff]
        %v802 = vld [vmem:[#allocation2 + $0x82] sm:$0xff]
        %v803 = vpack.c.bf16 %v792, %v791
        %v804 = vpack.c.bf16 %v794, %v793
        %v805 = vpack.c.bf16 %v796, %v795
        %v806 = vpack.c.bf16 %v798, %v797
        %v807 = vpack.c.bf16 %v800, %v799
        %v808 = vpack.c.bf16 %v802, %v801
        %809 = vst [vmem:[#allocation3 + $0x10] sm:$0xff] %v803
        %810 = vst [vmem:[#allocation3 + $0x28] sm:$0xff] %v804
        %811 = vst [vmem:[#allocation3 + $0x40] sm:$0xff] %v805
        %812 = vst [vmem:[#allocation3 + $0x58] sm:$0xff] %v806
        %813 = vst [vmem:[#allocation3 + $0x70] sm:$0xff] %v807
        %814 = vst [vmem:[#allocation3 + $0x88] sm:$0xff] %v808
        %v815 = vld [vmem:[#allocation3] sm:$0xff]
        %v816 = vld [vmem:[#allocation3 + $0x8] sm:$0xff]
        %v817 = vld [vmem:[#allocation3 + $0x10] sm:$0xff]
        %v818 = vld [vmem:[#allocation3 + $0x18] sm:$0xff]
        %v819 = vld [vmem:[#allocation3 + $0x20] sm:$0xff]
        %v820 = vld [vmem:[#allocation3 + $0x28] sm:$0xff]
        %v821 = vld [vmem:[#allocation3 + $0x30] sm:$0xff]
        %v822 = vld [vmem:[#allocation3 + $0x38] sm:$0xff]
        %v823 = vld [vmem:[#allocation3 + $0x40] sm:$0xff]
        %v824 = vld [vmem:[#allocation3 + $0x48] sm:$0xff]
        %v825 = vld [vmem:[#allocation3 + $0x50] sm:$0xff]
        %v826 = vld [vmem:[#allocation3 + $0x58] sm:$0xff]
        %v827 = vld [vmem:[#allocation9] sm:$0xf]
        %v828 = vld [vmem:[#allocation9 + $0x4] sm:$0xf]
        %v829 = vld [vmem:[#allocation9 + $0x8] sm:$0xf]
        %v830 = vld [vmem:[#allocation9 + $0xc] sm:$0xf]
        %v831 = vld [vmem:[#allocation9 + $0x10] sm:$0xf]
        %v832 = vld [vmem:[#allocation9 + $0x14] sm:$0xf]
        %v833 = vld [vmem:[#allocation9 + $0x18] sm:$0xf]
        %v834 = vld [vmem:[#allocation9 + $0x1c] sm:$0xf]
        %v835 = vld [vmem:[#allocation9 + $0x20] sm:$0xf]
        %v836 = vld [vmem:[#allocation9 + $0x24] sm:$0xf]
        %v837 = vld [vmem:[#allocation9 + $0x28] sm:$0xf]
        %v838 = vld [vmem:[#allocation9 + $0x2c] sm:$0xf]
        %v839 = vld [vmem:[#allocation9 + $0x30] sm:$0xf]
        %v840 = vld [vmem:[#allocation9 + $0x34] sm:$0xf]
        %v841 = vld [vmem:[#allocation9 + $0x38] sm:$0xf]
        %v842 = vld [vmem:[#allocation9 + $0x3c] sm:$0xf]
        %v843 = vld [vmem:[#allocation9 + $0x40] sm:$0xf]
        %v844 = vld [vmem:[#allocation9 + $0x44] sm:$0xf]
        %v845 = vld [vmem:[#allocation9 + $0x48] sm:$0xf]
        %v846 = vld [vmem:[#allocation9 + $0x4c] sm:$0xf]
        %v847 = vld [vmem:[#allocation9 + $0x50] sm:$0xf]
        %v848 = vld [vmem:[#allocation9 + $0x54] sm:$0xf]
        %v849 = vld [vmem:[#allocation9 + $0x58] sm:$0xf]
        %v850 = vld [vmem:[#allocation9 + $0x5c] sm:$0xf]
        %v851 = vld [vmem:[#allocation9 + $0x60] sm:$0xf]
        %v852 = vld [vmem:[#allocation9 + $0x64] sm:$0xf]
        %v853 = vld [vmem:[#allocation9 + $0x68] sm:$0xf]
        %v854 = vld [vmem:[#allocation9 + $0x6c] sm:$0xf]
        %v855 = vld [vmem:[#allocation9 + $0x70] sm:$0xf]
        %v856 = vld [vmem:[#allocation9 + $0x74] sm:$0xf]
        %v857 = vld [vmem:[#allocation9 + $0x78] sm:$0xf]
        %v858 = vld [vmem:[#allocation9 + $0x7c] sm:$0xf]
        %v859 = vld [vmem:[#allocation9 + $0x80] sm:$0xf]
        %v860 = vld [vmem:[#allocation9 + $0x84] sm:$0xf]
        %v861 = vld [vmem:[#allocation9 + $0x88] sm:$0xf]
        %v862 = vld [vmem:[#allocation9 + $0x8c] sm:$0xf]
        %v863 = vld [vmem:[#allocation9 + $0x90] sm:$0xf]
        %v864 = vld [vmem:[#allocation9 + $0x94] sm:$0xf]
        %v865 = vld [vmem:[#allocation9 + $0x98] sm:$0xf]
        %v866 = vld [vmem:[#allocation9 + $0x9c] sm:$0xf]
        %v867 = vld [vmem:[#allocation9 + $0xa0] sm:$0xf]
        %v868 = vld [vmem:[#allocation9 + $0xa4] sm:$0xf]
        %v869 = vld [vmem:[#allocation9 + $0xa8] sm:$0xf]
        %v870 = vld [vmem:[#allocation9 + $0xac] sm:$0xf]
        %v871 = vld [vmem:[#allocation9 + $0xb0] sm:$0xf]
        %v872 = vld [vmem:[#allocation9 + $0xb4] sm:$0xf]
        %v873 = vld [vmem:[#allocation9 + $0xb8] sm:$0xf]
        %v874 = vld [vmem:[#allocation9 + $0xbc] sm:$0xf]
        %s875 = scalar_lea.vmem [#allocation3], 24
        %v876 = vld [vmem:[%s875] sm:$0xff]
        %v877 = vld [vmem:[%s875 + $0x8] sm:$0xff]
        %v878 = vld [vmem:[%s875 + $0x10] sm:$0xff]
        %v879 = vld [vmem:[%s875 + $0x18] sm:$0xff]
        %v880 = vld [vmem:[%s875 + $0x20] sm:$0xff]
        %v881 = vld [vmem:[%s875 + $0x28] sm:$0xff]
        %v882 = vld [vmem:[%s875 + $0x30] sm:$0xff]
        %v883 = vld [vmem:[%s875 + $0x38] sm:$0xff]
        %v884 = vld [vmem:[%s875 + $0x40] sm:$0xff]
        %v885 = vld [vmem:[%s875 + $0x48] sm:$0xff]
        %v886 = vld [vmem:[%s875 + $0x50] sm:$0xff]
        %v887 = vld [vmem:[%s875 + $0x58] sm:$0xff]
        %s888 = scalar_lea.vmem [#allocation9], 192
        %v889 = vld [vmem:[%s888] sm:$0xf]
        %v890 = vld [vmem:[%s888 + $0x4] sm:$0xf]
        %v891 = vld [vmem:[%s888 + $0x8] sm:$0xf]
        %v892 = vld [vmem:[%s888 + $0xc] sm:$0xf]
        %v893 = vld [vmem:[%s888 + $0x10] sm:$0xf]
        %v894 = vld [vmem:[%s888 + $0x14] sm:$0xf]
        %v895 = vld [vmem:[%s888 + $0x18] sm:$0xf]
        %v896 = vld [vmem:[%s888 + $0x1c] sm:$0xf]
        %v897 = vld [vmem:[%s888 + $0x20] sm:$0xf]
        %v898 = vld [vmem:[%s888 + $0x24] sm:$0xf]
        %v899 = vld [vmem:[%s888 + $0x28] sm:$0xf]
        %v900 = vld [vmem:[%s888 + $0x2c] sm:$0xf]
        %v901 = vld [vmem:[%s888 + $0x30] sm:$0xf]
        %v902 = vld [vmem:[%s888 + $0x34] sm:$0xf]
        %v903 = vld [vmem:[%s888 + $0x38] sm:$0xf]
        %v904 = vld [vmem:[%s888 + $0x3c] sm:$0xf]
        %v905 = vld [vmem:[%s888 + $0x40] sm:$0xf]
        %v906 = vld [vmem:[%s888 + $0x44] sm:$0xf]
        %v907 = vld [vmem:[%s888 + $0x48] sm:$0xf]
        %v908 = vld [vmem:[%s888 + $0x4c] sm:$0xf]
        %v909 = vld [vmem:[%s888 + $0x50] sm:$0xf]
        %v910 = vld [vmem:[%s888 + $0x54] sm:$0xf]
        %v911 = vld [vmem:[%s888 + $0x58] sm:$0xf]
        %v912 = vld [vmem:[%s888 + $0x5c] sm:$0xf]
        %v913 = vld [vmem:[%s888 + $0x60] sm:$0xf]
        %v914 = vld [vmem:[%s888 + $0x64] sm:$0xf]
        %v915 = vld [vmem:[%s888 + $0x68] sm:$0xf]
        %v916 = vld [vmem:[%s888 + $0x6c] sm:$0xf]
        %v917 = vld [vmem:[%s888 + $0x70] sm:$0xf]
        %v918 = vld [vmem:[%s888 + $0x74] sm:$0xf]
        %v919 = vld [vmem:[%s888 + $0x78] sm:$0xf]
        %v920 = vld [vmem:[%s888 + $0x7c] sm:$0xf]
        %v921 = vld [vmem:[%s888 + $0x80] sm:$0xf]
        %v922 = vld [vmem:[%s888 + $0x84] sm:$0xf]
        %v923 = vld [vmem:[%s888 + $0x88] sm:$0xf]
        %v924 = vld [vmem:[%s888 + $0x8c] sm:$0xf]
        %v925 = vld [vmem:[%s888 + $0x90] sm:$0xf]
        %v926 = vld [vmem:[%s888 + $0x94] sm:$0xf]
        %v927 = vld [vmem:[%s888 + $0x98] sm:$0xf]
        %v928 = vld [vmem:[%s888 + $0x9c] sm:$0xf]
        %v929 = vld [vmem:[%s888 + $0xa0] sm:$0xf]
        %v930 = vld [vmem:[%s888 + $0xa4] sm:$0xf]
        %v931 = vld [vmem:[%s888 + $0xa8] sm:$0xf]
        %v932 = vld [vmem:[%s888 + $0xac] sm:$0xf]
        %v933 = vld [vmem:[%s888 + $0xb0] sm:$0xf]
        %v934 = vld [vmem:[%s888 + $0xb4] sm:$0xf]
        %v935 = vld [vmem:[%s888 + $0xb8] sm:$0xf]
        %v936 = vld [vmem:[%s888 + $0xbc] sm:$0xf]
        %v985 = vunpack.c.l.b16 %v889
        %v986 = vunpack.c.l.b16 %v890
        %v987 = vunpack.c.l.b16 %v891
        %v988 = vunpack.c.l.b16 %v892
        %v989 = vunpack.c.l.b16 %v893
        %v990 = vunpack.c.l.b16 %v894
        %v991 = vunpack.c.l.b16 %v895
        %v992 = vunpack.c.l.b16 %v896
        %v993 = vunpack.c.l.b16 %v897
        %v994 = vunpack.c.l.b16 %v898
        %v995 = vunpack.c.l.b16 %v899
        %v996 = vunpack.c.l.b16 %v900
        %v997 = vunpack.c.l.b16 %v901
        %v998 = vunpack.c.l.b16 %v902
        %v999 = vunpack.c.l.b16 %v903
        %v1000 = vunpack.c.l.b16 %v904
        %v1001 = vunpack.c.l.b16 %v905
        %v1002 = vunpack.c.l.b16 %v906
        %v1003 = vunpack.c.l.b16 %v907
        %v1004 = vunpack.c.l.b16 %v908
        %v1005 = vunpack.c.l.b16 %v909
        %v1006 = vunpack.c.l.b16 %v910
        %v1007 = vunpack.c.l.b16 %v911
        %v1008 = vunpack.c.l.b16 %v912
        %v1009 = vunpack.c.l.b16 %v913
        %v1010 = vunpack.c.l.b16 %v914
        %v1011 = vunpack.c.l.b16 %v915
        %v1012 = vunpack.c.l.b16 %v916
        %v1013 = vunpack.c.l.b16 %v917
        %v1014 = vunpack.c.l.b16 %v918
        %v1015 = vunpack.c.l.b16 %v919
        %v1016 = vunpack.c.l.b16 %v920
        %v1017 = vunpack.c.l.b16 %v921
        %v1018 = vunpack.c.l.b16 %v922
        %v1019 = vunpack.c.l.b16 %v923
        %v1020 = vunpack.c.l.b16 %v924
        %v1021 = vunpack.c.l.b16 %v925
        %v1022 = vunpack.c.l.b16 %v926
        %v1023 = vunpack.c.l.b16 %v927
        %v1024 = vunpack.c.l.b16 %v928
        %v1025 = vunpack.c.l.b16 %v929
        %v1026 = vunpack.c.l.b16 %v930
        %v1027 = vunpack.c.l.b16 %v931
        %v1028 = vunpack.c.l.b16 %v932
        %v1029 = vunpack.c.l.b16 %v933
        %v1030 = vunpack.c.l.b16 %v934
        %v1031 = vunpack.c.l.b16 %v935
        %v1032 = vunpack.c.l.b16 %v936
        %v1033 = vpack.c.b16 %v986, %v985
        %v1034 = vpack.c.b16 %v988, %v987
        %v1035 = vpack.c.b16 %v990, %v989
        %v1036 = vpack.c.b16 %v992, %v991
        %v1037 = vpack.c.b16 %v994, %v993
        %v1038 = vpack.c.b16 %v996, %v995
        %v1039 = vpack.c.b16 %v998, %v997
        %v1040 = vpack.c.b16 %v1000, %v999
        %v1041 = vpack.c.b16 %v1002, %v1001
        %v1042 = vpack.c.b16 %v1004, %v1003
        %v1043 = vpack.c.b16 %v1006, %v1005
        %v1044 = vpack.c.b16 %v1008, %v1007
        %v1045 = vpack.c.b16 %v1010, %v1009
        %v1046 = vpack.c.b16 %v1012, %v1011
        %v1047 = vpack.c.b16 %v1014, %v1013
        %v1048 = vpack.c.b16 %v1016, %v1015
        %v1049 = vpack.c.b16 %v1018, %v1017
        %v1050 = vpack.c.b16 %v1020, %v1019
        %v1051 = vpack.c.b16 %v1022, %v1021
        %v1052 = vpack.c.b16 %v1024, %v1023
        %v1053 = vpack.c.b16 %v1026, %v1025
        %v1054 = vpack.c.b16 %v1028, %v1027
        %v1055 = vpack.c.b16 %v1030, %v1029
        %v1056 = vpack.c.b16 %v1032, %v1031
        %1081 = vmatprep.subr.bf16.mxu0 0
        %1082 = vmatpush1.bf16.msra.mxu0 %v1033
        %1083 = vmatprep.subr.bf16.mxu0 0
        %1084 = vmatpush1.bf16.msra.mxu0 %v1034
        %1085 = vmatprep.subr.bf16.mxu0 0
        %1086 = vmatpush1.bf16.msra.mxu0 %v1035
        %1087 = vmatprep.subr.bf16.mxu0 0
        %1088 = vmatpush1.bf16.msra.mxu0 %v1036
        %1089 = vmatprep.subr.bf16.mxu0 0
        %1090 = vmatpush1.bf16.msra.mxu0 %v1037
        %1091 = vmatprep.subr.bf16.mxu0 0
        %1092 = vmatpush1.bf16.msra.mxu0 %v1038
        %1093 = vmatprep.subr.bf16.mxu0 0
        %1094 = vmatpush1.bf16.msra.mxu0 %v1039
        %1095 = vmatprep.subr.bf16.mxu0 0
        %1096 = vmatpush1.bf16.msra.mxu0 %v1040
        %1097 = vmatprep.subr.bf16.mxu0 0
        %1098 = vmatpush1.bf16.msra.mxu0 %v1041
        %1099 = vmatprep.subr.bf16.mxu0 0
        %1100 = vmatpush1.bf16.msra.mxu0 %v1042
        %1101 = vmatprep.subr.bf16.mxu0 0
        %1102 = vmatpush1.bf16.msra.mxu0 %v1043
        %1103 = vmatprep.subr.bf16.mxu0 0
        %1104 = vmatpush1.bf16.msra.mxu0 %v1044
        %1105 = vmatprep.subr.bf16.mxu0 0
        %1106 = vmatpush1.bf16.msra.mxu0 %v1045
        %1107 = vmatprep.subr.bf16.mxu0 0
        %1108 = vmatpush1.bf16.msra.mxu0 %v1046
        %1109 = vmatprep.subr.bf16.mxu0 0
        %1110 = vmatpush1.bf16.msra.mxu0 %v1047
        %1111 = vmatprep.subr.bf16.mxu0 0
        %1112 = vmatpush1.bf16.msra.mxu0 %v1048
        %1113 = vmatprep.mubr.bf16.mxu0 %v877
        %1114 = vmatmul.mubr.bf16.gmra.mrb[0].mxu0 %v876
        %v1115 = vpop.f32.mrb[0].mxu0
        %v1116 = vadd.f32 0.0, %v1115
        %v1117 = vpop.f32.mrb[0].mxu0
        %v1118 = vpop.f32.mrb[0].mxu0
        %v1119 = vadd.f32 0.0, %v1118
        %v1120 = vpop.f32.mrb[0].mxu0
        %1121 = vmatprep.mubr.bf16.mxu0 %v880
        %1122 = vmatmul.mubr.bf16.gmra.mrb[0].mxu0 %v879
        %v1123 = vpop.f32.mrb[0].mxu0
        %v1124 = vadd.f32 0.0, %v1123
        %v1125 = vpop.f32.mrb[0].mxu0
        %v1126 = vpop.f32.mrb[0].mxu0
        %v1127 = vadd.f32 0.0, %v1126
        %v1128 = vpop.f32.mrb[0].mxu0
        %1129 = vmatprep.mubr.bf16.mxu0 %v883
        %1130 = vmatmul.mubr.bf16.gmra.mrb[0].mxu0 %v882
        %v1131 = vpop.f32.mrb[0].mxu0
        %v1132 = vadd.f32 0.0, %v1131
        %v1133 = vpop.f32.mrb[0].mxu0
        %v1134 = vpop.f32.mrb[0].mxu0
        %v1135 = vadd.f32 0.0, %v1134
        %v1136 = vpop.f32.mrb[0].mxu0
        %1137 = vmatprep.mubr.bf16.mxu0 %v886
        %1138 = vmatmul.mubr.bf16.gmra.mrb[0].mxu0 %v885
        %v1139 = vpop.f32.mrb[0].mxu0
        %v1140 = vadd.f32 0.0, %v1139
        %v1141 = vpop.f32.mrb[0].mxu0
        %v1142 = vpop.f32.mrb[0].mxu0
        %v1143 = vadd.f32 0.0, %v1142
        %v1144 = vpop.f32.mrb[0].mxu0
        %1145 = vdwg.mxu0
        %1146 = vmatprep.subr.bf16.mxu0 0
        %1147 = vmatpush1.bf16.msra.mxu0 %v1049
        %1148 = vmatprep.subr.bf16.mxu0 0
        %1149 = vmatpush1.bf16.msra.mxu0 %v1050
        %1150 = vmatprep.subr.bf16.mxu0 0
        %1151 = vmatpush1.bf16.msra.mxu0 %v1051
        %1152 = vmatprep.subr.bf16.mxu0 0
        %1153 = vmatpush1.bf16.msra.mxu0 %v1052
        %1154 = vmatprep.subr.bf16.mxu0 0
        %1155 = vmatpush1.bf16.msra.mxu0 %v1053
        %1156 = vmatprep.subr.bf16.mxu0 0
        %1157 = vmatpush1.bf16.msra.mxu0 %v1054
        %1158 = vmatprep.subr.bf16.mxu0 0
        %1159 = vmatpush1.bf16.msra.mxu0 %v1055
        %1160 = vmatprep.subr.bf16.mxu0 0
        %1161 = vmatpush1.bf16.msra.mxu0 %v1056
        %1162 = vmatprep.subr.bf16.mxu0 0
        %1163 = vmatpush1.bf16.msra.mxu0 0
        %1164 = vmatprep.subr.bf16.mxu0 0
        %1165 = vmatpush1.bf16.msra.mxu0 0
        %1166 = vmatprep.subr.bf16.mxu0 0
        %1167 = vmatpush1.bf16.msra.mxu0 0
        %1168 = vmatprep.subr.bf16.mxu0 0
        %1169 = vmatpush1.bf16.msra.mxu0 0
        %1170 = vmatprep.subr.bf16.mxu0 0
        %1171 = vmatpush1.bf16.msra.mxu0 0
        %1172 = vmatprep.subr.bf16.mxu0 0
        %1173 = vmatpush1.bf16.msra.mxu0 0
        %1174 = vmatprep.subr.bf16.mxu0 0
        %1175 = vmatpush1.bf16.msra.mxu0 0
        %1176 = vmatprep.subr.bf16.mxu0 0
        %1177 = vmatpush1.bf16.msra.mxu0 0
        %1178 = vmatprep.mubr.bf16.mxu0 0
        %1179 = vmatmul.mubr.bf16.gmra.mrb[0].mxu0 %v878
        %v1180 = vpop.f32.mrb[0].mxu0
        %v1181 = vadd.f32 %v1116, %v1180
        %v1182 = vpop.f32.mrb[0].mxu0
        %v1183 = vpop.f32.mrb[0].mxu0
        %v1184 = vadd.f32 %v1119, %v1183
        %v1185 = vpop.f32.mrb[0].mxu0
        %1186 = vmatprep.mubr.bf16.mxu0 0
        %1187 = vmatmul.mubr.bf16.gmra.mrb[0].mxu0 %v881
        %v1188 = vpop.f32.mrb[0].mxu0
        %v1189 = vadd.f32 %v1124, %v1188
        %v1190 = vpop.f32.mrb[0].mxu0
        %v1191 = vpop.f32.mrb[0].mxu0
        %v1192 = vadd.f32 %v1127, %v1191
        %v1193 = vpop.f32.mrb[0].mxu0
        %1194 = vmatprep.mubr.bf16.mxu0 0
        %1195 = vmatmul.mubr.bf16.gmra.mrb[0].mxu0 %v884
        %v1196 = vpop.f32.mrb[0].mxu0
        %v1197 = vadd.f32 %v1132, %v1196
        %v1198 = vpop.f32.mrb[0].mxu0
        %v1199 = vpop.f32.mrb[0].mxu0
        %v1200 = vadd.f32 %v1135, %v1199
        %v1201 = vpop.f32.mrb[0].mxu0
        %1202 = vmatprep.mubr.bf16.mxu0 0
        %1203 = vmatmul.mubr.bf16.gmra.mrb[0].mxu0 %v887
        %v1204 = vpop.f32.mrb[0].mxu0
        %v1205 = vadd.f32 %v1140, %v1204
        %v1206 = vpop.f32.mrb[0].mxu0
        %v1207 = vpop.f32.mrb[0].mxu0
        %v1208 = vadd.f32 %v1143, %v1207
        %v1209 = vpop.f32.mrb[0].mxu0
        %1210 = vdwg.mxu0
        %v1259 = vunpack.c.l.b16 %v827
        %v1260 = vunpack.c.l.b16 %v828
        %v1261 = vunpack.c.l.b16 %v829
        %v1262 = vunpack.c.l.b16 %v830
        %v1263 = vunpack.c.l.b16 %v831
        %v1264 = vunpack.c.l.b16 %v832
        %v1265 = vunpack.c.l.b16 %v833
        %v1266 = vunpack.c.l.b16 %v834
        %v1267 = vunpack.c.l.b16 %v835
        %v1268 = vunpack.c.l.b16 %v836
        %v1269 = vunpack.c.l.b16 %v837
        %v1270 = vunpack.c.l.b16 %v838
        %v1271 = vunpack.c.l.b16 %v839
        %v1272 = vunpack.c.l.b16 %v840
        %v1273 = vunpack.c.l.b16 %v841
        %v1274 = vunpack.c.l.b16 %v842
        %v1275 = vunpack.c.l.b16 %v843
        %v1276 = vunpack.c.l.b16 %v844
        %v1277 = vunpack.c.l.b16 %v845
        %v1278 = vunpack.c.l.b16 %v846
        %v1279 = vunpack.c.l.b16 %v847
        %v1280 = vunpack.c.l.b16 %v848
        %v1281 = vunpack.c.l.b16 %v849
        %v1282 = vunpack.c.l.b16 %v850
        %v1283 = vunpack.c.l.b16 %v851
        %v1284 = vunpack.c.l.b16 %v852
        %v1285 = vunpack.c.l.b16 %v853
        %v1286 = vunpack.c.l.b16 %v854
        %v1287 = vunpack.c.l.b16 %v855
        %v1288 = vunpack.c.l.b16 %v856
        %v1289 = vunpack.c.l.b16 %v857
        %v1290 = vunpack.c.l.b16 %v858
        %v1291 = vunpack.c.l.b16 %v859
        %v1292 = vunpack.c.l.b16 %v860
        %v1293 = vunpack.c.l.b16 %v861
        %v1294 = vunpack.c.l.b16 %v862
        %v1295 = vunpack.c.l.b16 %v863
        %v1296 = vunpack.c.l.b16 %v864
        %v1297 = vunpack.c.l.b16 %v865
        %v1298 = vunpack.c.l.b16 %v866
        %v1299 = vunpack.c.l.b16 %v867
        %v1300 = vunpack.c.l.b16 %v868
        %v1301 = vunpack.c.l.b16 %v869
        %v1302 = vunpack.c.l.b16 %v870
        %v1303 = vunpack.c.l.b16 %v871
        %v1304 = vunpack.c.l.b16 %v872
        %v1305 = vunpack.c.l.b16 %v873
        %v1306 = vunpack.c.l.b16 %v874
        %v1307 = vpack.c.b16 %v1260, %v1259
        %v1308 = vpack.c.b16 %v1262, %v1261
        %v1309 = vpack.c.b16 %v1264, %v1263
        %v1310 = vpack.c.b16 %v1266, %v1265
        %v1311 = vpack.c.b16 %v1268, %v1267
        %v1312 = vpack.c.b16 %v1270, %v1269
        %v1313 = vpack.c.b16 %v1272, %v1271
        %v1314 = vpack.c.b16 %v1274, %v1273
        %v1315 = vpack.c.b16 %v1276, %v1275
        %v1316 = vpack.c.b16 %v1278, %v1277
        %v1317 = vpack.c.b16 %v1280, %v1279
        %v1318 = vpack.c.b16 %v1282, %v1281
        %v1319 = vpack.c.b16 %v1284, %v1283
        %v1320 = vpack.c.b16 %v1286, %v1285
        %v1321 = vpack.c.b16 %v1288, %v1287
        %v1322 = vpack.c.b16 %v1290, %v1289
        %v1323 = vpack.c.b16 %v1292, %v1291
        %v1324 = vpack.c.b16 %v1294, %v1293
        %v1325 = vpack.c.b16 %v1296, %v1295
        %v1326 = vpack.c.b16 %v1298, %v1297
        %v1327 = vpack.c.b16 %v1300, %v1299
        %v1328 = vpack.c.b16 %v1302, %v1301
        %v1329 = vpack.c.b16 %v1304, %v1303
        %v1330 = vpack.c.b16 %v1306, %v1305
        %1355 = vmatprep.subr.bf16.mxu0 0
        %1356 = vmatpush1.bf16.msra.mxu0 %v1307
        %1357 = vmatprep.subr.bf16.mxu0 0
        %1358 = vmatpush1.bf16.msra.mxu0 %v1308
        %1359 = vmatprep.subr.bf16.mxu0 0
        %1360 = vmatpush1.bf16.msra.mxu0 %v1309
        %1361 = vmatprep.subr.bf16.mxu0 0
        %1362 = vmatpush1.bf16.msra.mxu0 %v1310
        %1363 = vmatprep.subr.bf16.mxu0 0
        %1364 = vmatpush1.bf16.msra.mxu0 %v1311
        %1365 = vmatprep.subr.bf16.mxu0 0
        %1366 = vmatpush1.bf16.msra.mxu0 %v1312
        %1367 = vmatprep.subr.bf16.mxu0 0
        %1368 = vmatpush1.bf16.msra.mxu0 %v1313
        %1369 = vmatprep.subr.bf16.mxu0 0
        %1370 = vmatpush1.bf16.msra.mxu0 %v1314
        %1371 = vmatprep.subr.bf16.mxu0 0
        %1372 = vmatpush1.bf16.msra.mxu0 %v1315
        %1373 = vmatprep.subr.bf16.mxu0 0
        %1374 = vmatpush1.bf16.msra.mxu0 %v1316
        %1375 = vmatprep.subr.bf16.mxu0 0
        %1376 = vmatpush1.bf16.msra.mxu0 %v1317
        %1377 = vmatprep.subr.bf16.mxu0 0
        %1378 = vmatpush1.bf16.msra.mxu0 %v1318
        %1379 = vmatprep.subr.bf16.mxu0 0
        %1380 = vmatpush1.bf16.msra.mxu0 %v1319
        %1381 = vmatprep.subr.bf16.mxu0 0
        %1382 = vmatpush1.bf16.msra.mxu0 %v1320
        %1383 = vmatprep.subr.bf16.mxu0 0
        %1384 = vmatpush1.bf16.msra.mxu0 %v1321
        %1385 = vmatprep.subr.bf16.mxu0 0
        %1386 = vmatpush1.bf16.msra.mxu0 %v1322
        %1387 = vmatprep.mubr.bf16.mxu0 %v816
        %1388 = vmatmul.mubr.bf16.gmra.mrb[0].mxu0 %v815
        %v1389 = vpop.f32.mrb[0].mxu0
        %v1390 = vadd.f32 %v1181, %v1389
        %v1391 = vpop.f32.mrb[0].mxu0
        %v1392 = vpop.f32.mrb[0].mxu0
        %v1393 = vadd.f32 %v1184, %v1392
        %v1394 = vpop.f32.mrb[0].mxu0
        %1395 = vmatprep.mubr.bf16.mxu0 %v819
        %1396 = vmatmul.mubr.bf16.gmra.mrb[0].mxu0 %v818
        %v1397 = vpop.f32.mrb[0].mxu0
        %v1398 = vadd.f32 %v1189, %v1397
        %v1399 = vpop.f32.mrb[0].mxu0
        %v1400 = vpop.f32.mrb[0].mxu0
        %v1401 = vadd.f32 %v1192, %v1400
        %v1402 = vpop.f32.mrb[0].mxu0
        %1403 = vmatprep.mubr.bf16.mxu0 %v822
        %1404 = vmatmul.mubr.bf16.gmra.mrb[0].mxu0 %v821
        %v1405 = vpop.f32.mrb[0].mxu0
        %v1406 = vadd.f32 %v1197, %v1405
        %v1407 = vpop.f32.mrb[0].mxu0
        %v1408 = vpop.f32.mrb[0].mxu0
        %v1409 = vadd.f32 %v1200, %v1408
        %v1410 = vpop.f32.mrb[0].mxu0
        %1411 = vmatprep.mubr.bf16.mxu0 %v825
        %1412 = vmatmul.mubr.bf16.gmra.mrb[0].mxu0 %v824
        %v1413 = vpop.f32.mrb[0].mxu0
        %v1414 = vadd.f32 %v1205, %v1413
        %v1415 = vpop.f32.mrb[0].mxu0
        %v1416 = vpop.f32.mrb[0].mxu0
        %v1417 = vadd.f32 %v1208, %v1416
        %v1418 = vpop.f32.mrb[0].mxu0
        %1419 = vdwg.mxu0
        %1420 = vmatprep.subr.bf16.mxu0 0
        %1421 = vmatpush1.bf16.msra.mxu0 %v1323
        %1422 = vmatprep.subr.bf16.mxu0 0
        %1423 = vmatpush1.bf16.msra.mxu0 %v1324
        %1424 = vmatprep.subr.bf16.mxu0 0
        %1425 = vmatpush1.bf16.msra.mxu0 %v1325
        %1426 = vmatprep.subr.bf16.mxu0 0
        %1427 = vmatpush1.bf16.msra.mxu0 %v1326
        %1428 = vmatprep.subr.bf16.mxu0 0
        %1429 = vmatpush1.bf16.msra.mxu0 %v1327
        %1430 = vmatprep.subr.bf16.mxu0 0
        %1431 = vmatpush1.bf16.msra.mxu0 %v1328
        %1432 = vmatprep.subr.bf16.mxu0 0
        %1433 = vmatpush1.bf16.msra.mxu0 %v1329
        %1434 = vmatprep.subr.bf16.mxu0 0
        %1435 = vmatpush1.bf16.msra.mxu0 %v1330
        %1436 = vmatprep.subr.bf16.mxu0 0
        %1437 = vmatpush1.bf16.msra.mxu0 0
        %1438 = vmatprep.subr.bf16.mxu0 0
        %1439 = vmatpush1.bf16.msra.mxu0 0
        %1440 = vmatprep.subr.bf16.mxu0 0
        %1441 = vmatpush1.bf16.msra.mxu0 0
        %1442 = vmatprep.subr.bf16.mxu0 0
        %1443 = vmatpush1.bf16.msra.mxu0 0
        %1444 = vmatprep.subr.bf16.mxu0 0
        %1445 = vmatpush1.bf16.msra.mxu0 0
        %1446 = vmatprep.subr.bf16.mxu0 0
        %1447 = vmatpush1.bf16.msra.mxu0 0
        %1448 = vmatprep.subr.bf16.mxu0 0
        %1449 = vmatpush1.bf16.msra.mxu0 0
        %1450 = vmatprep.subr.bf16.mxu0 0
        %1451 = vmatpush1.bf16.msra.mxu0 0
        %1452 = vmatprep.mubr.bf16.mxu0 0
        %1453 = vmatmul.mubr.bf16.gmra.mrb[0].mxu0 %v817
        %v1454 = vpop.f32.mrb[0].mxu0
        %v1455 = vadd.f32 %v1390, %v1454
        %v1456 = vpop.f32.mrb[0].mxu0
        %v1457 = vpop.f32.mrb[0].mxu0
        %v1458 = vadd.f32 %v1393, %v1457
        %v1459 = vpop.f32.mrb[0].mxu0
        %1460 = vmatprep.mubr.bf16.mxu0 0
        %1461 = vmatmul.mubr.bf16.gmra.mrb[0].mxu0 %v820
        %v1462 = vpop.f32.mrb[0].mxu0
        %v1463 = vadd.f32 %v1398, %v1462
        %v1464 = vpop.f32.mrb[0].mxu0
        %v1465 = vpop.f32.mrb[0].mxu0
        %v1466 = vadd.f32 %v1401, %v1465
        %v1467 = vpop.f32.mrb[0].mxu0
        %1468 = vmatprep.mubr.bf16.mxu0 0
        %1469 = vmatmul.mubr.bf16.gmra.mrb[0].mxu0 %v823
        %v1470 = vpop.f32.mrb[0].mxu0
        %v1471 = vadd.f32 %v1406, %v1470
        %v1472 = vpop.f32.mrb[0].mxu0
        %v1473 = vpop.f32.mrb[0].mxu0
        %v1474 = vadd.f32 %v1409, %v1473
        %v1475 = vpop.f32.mrb[0].mxu0
        %1476 = vmatprep.mubr.bf16.mxu0 0
        %1477 = vmatmul.mubr.bf16.gmra.mrb[0].mxu0 %v826
        %v1478 = vpop.f32.mrb[0].mxu0
        %v1479 = vadd.f32 %v1414, %v1478
        %v1480 = vpop.f32.mrb[0].mxu0
        %v1481 = vpop.f32.mrb[0].mxu0
        %v1482 = vadd.f32 %v1417, %v1481
        %v1483 = vpop.f32.mrb[0].mxu0
        %1484 = vdwg.mxu0
        %s1485 = scalar_lea.vmem [#allocation3], 48
        %v1486 = vld [vmem:[%s1485] sm:$0xff]
        %v1487 = vld [vmem:[%s1485 + $0x8] sm:$0xff]
        %v1488 = vld [vmem:[%s1485 + $0x10] sm:$0xff]
        %v1489 = vld [vmem:[%s1485 + $0x18] sm:$0xff]
        %v1490 = vld [vmem:[%s1485 + $0x20] sm:$0xff]
        %v1491 = vld [vmem:[%s1485 + $0x28] sm:$0xff]
        %v1492 = vld [vmem:[%s1485 + $0x30] sm:$0xff]
        %v1493 = vld [vmem:[%s1485 + $0x38] sm:$0xff]
        %v1494 = vld [vmem:[%s1485 + $0x40] sm:$0xff]
        %v1495 = vld [vmem:[%s1485 + $0x48] sm:$0xff]
        %v1496 = vld [vmem:[%s1485 + $0x50] sm:$0xff]
        %v1497 = vld [vmem:[%s1485 + $0x58] sm:$0xff]
        %s1498 = scalar_lea.vmem [#allocation9], 384
        %v1499 = vld [vmem:[%s1498] sm:$0xf]
        %v1500 = vld [vmem:[%s1498 + $0x4] sm:$0xf]
        %v1501 = vld [vmem:[%s1498 + $0x8] sm:$0xf]
        %v1502 = vld [vmem:[%s1498 + $0xc] sm:$0xf]
        %v1503 = vld [vmem:[%s1498 + $0x10] sm:$0xf]
        %v1504 = vld [vmem:[%s1498 + $0x14] sm:$0xf]
        %v1505 = vld [vmem:[%s1498 + $0x18] sm:$0xf]
        %v1506 = vld [vmem:[%s1498 + $0x1c] sm:$0xf]
        %v1507 = vld [vmem:[%s1498 + $0x20] sm:$0xf]
        %v1508 = vld [vmem:[%s1498 + $0x24] sm:$0xf]
        %v1509 = vld [vmem:[%s1498 + $0x28] sm:$0xf]
        %v1510 = vld [vmem:[%s1498 + $0x2c] sm:$0xf]
        %v1511 = vld [vmem:[%s1498 + $0x30] sm:$0xf]
        %v1512 = vld [vmem:[%s1498 + $0x34] sm:$0xf]
        %v1513 = vld [vmem:[%s1498 + $0x38] sm:$0xf]
        %v1514 = vld [vmem:[%s1498 + $0x3c] sm:$0xf]
        %v1515 = vld [vmem:[%s1498 + $0x40] sm:$0xf]
        %v1516 = vld [vmem:[%s1498 + $0x44] sm:$0xf]
        %v1517 = vld [vmem:[%s1498 + $0x48] sm:$0xf]
        %v1518 = vld [vmem:[%s1498 + $0x4c] sm:$0xf]
        %v1519 = vld [vmem:[%s1498 + $0x50] sm:$0xf]
        %v1520 = vld [vmem:[%s1498 + $0x54] sm:$0xf]
        %v1521 = vld [vmem:[%s1498 + $0x58] sm:$0xf]
        %v1522 = vld [vmem:[%s1498 + $0x5c] sm:$0xf]
        %v1523 = vld [vmem:[%s1498 + $0x60] sm:$0xf]
        %v1524 = vld [vmem:[%s1498 + $0x64] sm:$0xf]
        %v1525 = vld [vmem:[%s1498 + $0x68] sm:$0xf]
        %v1526 = vld [vmem:[%s1498 + $0x6c] sm:$0xf]
        %v1527 = vld [vmem:[%s1498 + $0x70] sm:$0xf]
        %v1528 = vld [vmem:[%s1498 + $0x74] sm:$0xf]
        %v1529 = vld [vmem:[%s1498 + $0x78] sm:$0xf]
        %v1530 = vld [vmem:[%s1498 + $0x7c] sm:$0xf]
        %v1531 = vld [vmem:[%s1498 + $0x80] sm:$0xf]
        %v1532 = vld [vmem:[%s1498 + $0x84] sm:$0xf]
        %v1533 = vld [vmem:[%s1498 + $0x88] sm:$0xf]
        %v1534 = vld [vmem:[%s1498 + $0x8c] sm:$0xf]
        %v1535 = vld [vmem:[%s1498 + $0x90] sm:$0xf]
        %v1536 = vld [vmem:[%s1498 + $0x94] sm:$0xf]
        %v1537 = vld [vmem:[%s1498 + $0x98] sm:$0xf]
        %v1538 = vld [vmem:[%s1498 + $0x9c] sm:$0xf]
        %v1539 = vld [vmem:[%s1498 + $0xa0] sm:$0xf]
        %v1540 = vld [vmem:[%s1498 + $0xa4] sm:$0xf]
        %v1541 = vld [vmem:[%s1498 + $0xa8] sm:$0xf]
        %v1542 = vld [vmem:[%s1498 + $0xac] sm:$0xf]
        %v1543 = vld [vmem:[%s1498 + $0xb0] sm:$0xf]
        %v1544 = vld [vmem:[%s1498 + $0xb4] sm:$0xf]
        %v1545 = vld [vmem:[%s1498 + $0xb8] sm:$0xf]
        %v1546 = vld [vmem:[%s1498 + $0xbc] sm:$0xf]
        %v1595 = vunpack.c.l.b16 %v1499
        %v1596 = vunpack.c.l.b16 %v1500
        %v1597 = vunpack.c.l.b16 %v1501
        %v1598 = vunpack.c.l.b16 %v1502
        %v1599 = vunpack.c.l.b16 %v1503
        %v1600 = vunpack.c.l.b16 %v1504
        %v1601 = vunpack.c.l.b16 %v1505
        %v1602 = vunpack.c.l.b16 %v1506
        %v1603 = vunpack.c.l.b16 %v1507
        %v1604 = vunpack.c.l.b16 %v1508
        %v1605 = vunpack.c.l.b16 %v1509
        %v1606 = vunpack.c.l.b16 %v1510
        %v1607 = vunpack.c.l.b16 %v1511
        %v1608 = vunpack.c.l.b16 %v1512
        %v1609 = vunpack.c.l.b16 %v1513
        %v1610 = vunpack.c.l.b16 %v1514
        %v1611 = vunpack.c.l.b16 %v1515
        %v1612 = vunpack.c.l.b16 %v1516
        %v1613 = vunpack.c.l.b16 %v1517
        %v1614 = vunpack.c.l.b16 %v1518
        %v1615 = vunpack.c.l.b16 %v1519
        %v1616 = vunpack.c.l.b16 %v1520
        %v1617 = vunpack.c.l.b16 %v1521
        %v1618 = vunpack.c.l.b16 %v1522
        %v1619 = vunpack.c.l.b16 %v1523
        %v1620 = vunpack.c.l.b16 %v1524
        %v1621 = vunpack.c.l.b16 %v1525
        %v1622 = vunpack.c.l.b16 %v1526
        %v1623 = vunpack.c.l.b16 %v1527
        %v1624 = vunpack.c.l.b16 %v1528
        %v1625 = vunpack.c.l.b16 %v1529
        %v1626 = vunpack.c.l.b16 %v1530
        %v1627 = vunpack.c.l.b16 %v1531
        %v1628 = vunpack.c.l.b16 %v1532
        %v1629 = vunpack.c.l.b16 %v1533
        %v1630 = vunpack.c.l.b16 %v1534
        %v1631 = vunpack.c.l.b16 %v1535
        %v1632 = vunpack.c.l.b16 %v1536
        %v1633 = vunpack.c.l.b16 %v1537
        %v1634 = vunpack.c.l.b16 %v1538
        %v1635 = vunpack.c.l.b16 %v1539
        %v1636 = vunpack.c.l.b16 %v1540
        %v1637 = vunpack.c.l.b16 %v1541
        %v1638 = vunpack.c.l.b16 %v1542
        %v1639 = vunpack.c.l.b16 %v1543
        %v1640 = vunpack.c.l.b16 %v1544
        %v1641 = vunpack.c.l.b16 %v1545
        %v1642 = vunpack.c.l.b16 %v1546
        %v1643 = vpack.c.b16 %v1596, %v1595
        %v1644 = vpack.c.b16 %v1598, %v1597
        %v1645 = vpack.c.b16 %v1600, %v1599
        %v1646 = vpack.c.b16 %v1602, %v1601
        %v1647 = vpack.c.b16 %v1604, %v1603
        %v1648 = vpack.c.b16 %v1606, %v1605
        %v1649 = vpack.c.b16 %v1608, %v1607
        %v1650 = vpack.c.b16 %v1610, %v1609
        %v1651 = vpack.c.b16 %v1612, %v1611
        %v1652 = vpack.c.b16 %v1614, %v1613
        %v1653 = vpack.c.b16 %v1616, %v1615
        %v1654 = vpack.c.b16 %v1618, %v1617
        %v1655 = vpack.c.b16 %v1620, %v1619
        %v1656 = vpack.c.b16 %v1622, %v1621
        %v1657 = vpack.c.b16 %v1624, %v1623
        %v1658 = vpack.c.b16 %v1626, %v1625
        %v1659 = vpack.c.b16 %v1628, %v1627
        %v1660 = vpack.c.b16 %v1630, %v1629
        %v1661 = vpack.c.b16 %v1632, %v1631
        %v1662 = vpack.c.b16 %v1634, %v1633
        %v1663 = vpack.c.b16 %v1636, %v1635
        %v1664 = vpack.c.b16 %v1638, %v1637
        %v1665 = vpack.c.b16 %v1640, %v1639
        %v1666 = vpack.c.b16 %v1642, %v1641
        %1691 = vmatprep.subr.bf16.mxu0 0
        %1692 = vmatpush1.bf16.msra.mxu0 %v1643
        %1693 = vmatprep.subr.bf16.mxu0 0
        %1694 = vmatpush1.bf16.msra.mxu0 %v1644
        %1695 = vmatprep.subr.bf16.mxu0 0
        %1696 = vmatpush1.bf16.msra.mxu0 %v1645
        %1697 = vmatprep.subr.bf16.mxu0 0
        %1698 = vmatpush1.bf16.msra.mxu0 %v1646
        %1699 = vmatprep.subr.bf16.mxu0 0
        %1700 = vmatpush1.bf16.msra.mxu0 %v1647
        %1701 = vmatprep.subr.bf16.mxu0 0
        %1702 = vmatpush1.bf16.msra.mxu0 %v1648
        %1703 = vmatprep.subr.bf16.mxu0 0
        %1704 = vmatpush1.bf16.msra.mxu0 %v1649
        %1705 = vmatprep.subr.bf16.mxu0 0
        %1706 = vmatpush1.bf16.msra.mxu0 %v1650
        %1707 = vmatprep.subr.bf16.mxu0 0
        %1708 = vmatpush1.bf16.msra.mxu0 %v1651
        %1709 = vmatprep.subr.bf16.mxu0 0
        %1710 = vmatpush1.bf16.msra.mxu0 %v1652
        %1711 = vmatprep.subr.bf16.mxu0 0
        %1712 = vmatpush1.bf16.msra.mxu0 %v1653
        %1713 = vmatprep.subr.bf16.mxu0 0
        %1714 = vmatpush1.bf16.msra.mxu0 %v1654
        %1715 = vmatprep.subr.bf16.mxu0 0
        %1716 = vmatpush1.bf16.msra.mxu0 %v1655
        %1717 = vmatprep.subr.bf16.mxu0 0
        %1718 = vmatpush1.bf16.msra.mxu0 %v1656
        %1719 = vmatprep.subr.bf16.mxu0 0
        %1720 = vmatpush1.bf16.msra.mxu0 %v1657
        %1721 = vmatprep.subr.bf16.mxu0 0
        %1722 = vmatpush1.bf16.msra.mxu0 %v1658
        %1723 = vmatprep.mubr.bf16.mxu0 %v1487
        %1724 = vmatmul.mubr.bf16.gmra.mrb[0].mxu0 %v1486
        %v1725 = vpop.f32.mrb[0].mxu0
        %v1726 = vadd.f32 0.0, %v1725
        %v1727 = vpop.f32.mrb[0].mxu0
        %v1728 = vpop.f32.mrb[0].mxu0
        %v1729 = vadd.f32 0.0, %v1728
        %v1730 = vpop.f32.mrb[0].mxu0
        %1731 = vmatprep.mubr.bf16.mxu0 %v1490
        %1732 = vmatmul.mubr.bf16.gmra.mrb[0].mxu0 %v1489
        %v1733 = vpop.f32.mrb[0].mxu0
        %v1734 = vadd.f32 0.0, %v1733
        %v1735 = vpop.f32.mrb[0].mxu0
        %v1736 = vpop.f32.mrb[0].mxu0
        %v1737 = vadd.f32 0.0, %v1736
        %v1738 = vpop.f32.mrb[0].mxu0
        %1739 = vmatprep.mubr.bf16.mxu0 %v1493
        %1740 = vmatmul.mubr.bf16.gmra.mrb[0].mxu0 %v1492
        %v1741 = vpop.f32.mrb[0].mxu0
        %v1742 = vadd.f32 0.0, %v1741
        %v1743 = vpop.f32.mrb[0].mxu0
        %v1744 = vpop.f32.mrb[0].mxu0
        %v1745 = vadd.f32 0.0, %v1744
        %v1746 = vpop.f32.mrb[0].mxu0
        %1747 = vmatprep.mubr.bf16.mxu0 %v1496
        %1748 = vmatmul.mubr.bf16.gmra.mrb[0].mxu0 %v1495
        %v1749 = vpop.f32.mrb[0].mxu0
        %v1750 = vadd.f32 0.0, %v1749
        %v1751 = vpop.f32.mrb[0].mxu0
        %v1752 = vpop.f32.mrb[0].mxu0
        %v1753 = vadd.f32 0.0, %v1752
        %v1754 = vpop.f32.mrb[0].mxu0
        %1755 = vdwg.mxu0
        %1756 = vmatprep.subr.bf16.mxu0 0
        %1757 = vmatpush1.bf16.msra.mxu0 %v1659
        %1758 = vmatprep.subr.bf16.mxu0 0
        %1759 = vmatpush1.bf16.msra.mxu0 %v1660
        %1760 = vmatprep.subr.bf16.mxu0 0
        %1761 = vmatpush1.bf16.msra.mxu0 %v1661
        %1762 = vmatprep.subr.bf16.mxu0 0
        %1763 = vmatpush1.bf16.msra.mxu0 %v1662
        %1764 = vmatprep.subr.bf16.mxu0 0
        %1765 = vmatpush1.bf16.msra.mxu0 %v1663
        %1766 = vmatprep.subr.bf16.mxu0 0
        %1767 = vmatpush1.bf16.msra.mxu0 %v1664
        %1768 = vmatprep.subr.bf16.mxu0 0
        %1769 = vmatpush1.bf16.msra.mxu0 %v1665
        %1770 = vmatprep.subr.bf16.mxu0 0
        %1771 = vmatpush1.bf16.msra.mxu0 %v1666
        %1772 = vmatprep.subr.bf16.mxu0 0
        %1773 = vmatpush1.bf16.msra.mxu0 0
        %1774 = vmatprep.subr.bf16.mxu0 0
        %1775 = vmatpush1.bf16.msra.mxu0 0
        %1776 = vmatprep.subr.bf16.mxu0 0
        %1777 = vmatpush1.bf16.msra.mxu0 0
        %1778 = vmatprep.subr.bf16.mxu0 0
        %1779 = vmatpush1.bf16.msra.mxu0 0
        %1780 = vmatprep.subr.bf16.mxu0 0
        %1781 = vmatpush1.bf16.msra.mxu0 0
        %1782 = vmatprep.subr.bf16.mxu0 0
        %1783 = vmatpush1.bf16.msra.mxu0 0
        %1784 = vmatprep.subr.bf16.mxu0 0
        %1785 = vmatpush1.bf16.msra.mxu0 0
        %1786 = vmatprep.subr.bf16.mxu0 0
        %1787 = vmatpush1.bf16.msra.mxu0 0
        %1788 = vmatprep.mubr.bf16.mxu0 0
        %1789 = vmatmul.mubr.bf16.gmra.mrb[0].mxu0 %v1488
        %v1790 = vpop.f32.mrb[0].mxu0
        %v1791 = vadd.f32 %v1726, %v1790
        %v1792 = vpop.f32.mrb[0].mxu0
        %v1793 = vpop.f32.mrb[0].mxu0
        %v1794 = vadd.f32 %v1729, %v1793
        %v1795 = vpop.f32.mrb[0].mxu0
        %1796 = vmatprep.mubr.bf16.mxu0 0
        %1797 = vmatmul.mubr.bf16.gmra.mrb[0].mxu0 %v1491
        %v1798 = vpop.f32.mrb[0].mxu0
        %v1799 = vadd.f32 %v1734, %v1798
        %v1800 = vpop.f32.mrb[0].mxu0
        %v1801 = vpop.f32.mrb[0].mxu0
        %v1802 = vadd.f32 %v1737, %v1801
        %v1803 = vpop.f32.mrb[0].mxu0
        %1804 = vmatprep.mubr.bf16.mxu0 0
        %1805 = vmatmul.mubr.bf16.gmra.mrb[0].mxu0 %v1494
        %v1806 = vpop.f32.mrb[0].mxu0
        %v1807 = vadd.f32 %v1742, %v1806
        %v1808 = vpop.f32.mrb[0].mxu0
        %v1809 = vpop.f32.mrb[0].mxu0
        %v1810 = vadd.f32 %v1745, %v1809
        %v1811 = vpop.f32.mrb[0].mxu0
        %1812 = vmatprep.mubr.bf16.mxu0 0
        %1813 = vmatmul.mubr.bf16.gmra.mrb[0].mxu0 %v1497
        %v1814 = vpop.f32.mrb[0].mxu0
        %v1815 = vadd.f32 %v1750, %v1814
        %v1816 = vpop.f32.mrb[0].mxu0
        %v1817 = vpop.f32.mrb[0].mxu0
        %v1818 = vadd.f32 %v1753, %v1817
        %v1819 = vpop.f32.mrb[0].mxu0
        %1820 = vdwg.mxu0
        %v1821 = vadd.f32 %v1455, %v1791
        %v1822 = vadd.f32 %v1458, %v1794
        %v1823 = vadd.f32 %v1463, %v1799
        %v1824 = vadd.f32 %v1466, %v1802
        %v1825 = vadd.f32 %v1471, %v1807
        %v1826 = vadd.f32 %v1474, %v1810
        %v1827 = vadd.f32 %v1479, %v1815
        %v1828 = vadd.f32 %v1482, %v1818
        %v1829 = vld [vmem:[%s4] sm:$0x1]
        %v1831 = vlaneseq
        %v1832 = vshrl.u32 %v1831, 7
        %v1833 = vsub.s32 0, %v1832
        %v1834 = vrot.slane %v1829, %v1833
        %v1836 = vadd.f32 %v1821, %v1834
        %v1837 = vadd.f32 %v1822, %v1834
        %v1838 = vadd.f32 %v1823, %v1834
        %v1839 = vadd.f32 %v1824, %v1834
        %v1840 = vadd.f32 %v1825, %v1834
        %v1841 = vadd.f32 %v1826, %v1834
        %v1842 = vadd.f32 %v1827, %v1834
        %v1843 = vadd.f32 %v1828, %v1834
        %v1844 = vmax.f32 %v1836, 0.0
        %v1845 = vmax.f32 %v1837, 0.0
        %v1846 = vmax.f32 %v1838, 0.0
        %v1847 = vmax.f32 %v1839, 0.0
        %v1848 = vmax.f32 %v1840, 0.0
        %v1849 = vmax.f32 %v1841, 0.0
        %v1850 = vmax.f32 %v1842, 0.0
        %v1851 = vmax.f32 %v1843, 0.0
        %v1852 = vpack.c.bf16 %v1845, %v1844
        %v1853 = vpack.c.bf16 %v1847, %v1846
        %v1854 = vpack.c.bf16 %v1849, %v1848
        %v1855 = vpack.c.bf16 %v1851, %v1850
        %v1856 = vld [vmem:[#allocation10] sm:$0xf]
        %v1857 = vld [vmem:[#allocation10 + $0x4] sm:$0xf]
        %v1858 = vld [vmem:[#allocation10 + $0x8] sm:$0xf]
        %v1859 = vld [vmem:[#allocation10 + $0xc] sm:$0xf]
        %v1860 = vld [vmem:[#allocation10 + $0x10] sm:$0xf]
        %v1861 = vld [vmem:[#allocation10 + $0x14] sm:$0xf]
        %v1862 = vld [vmem:[#allocation10 + $0x18] sm:$0xf]
        %v1863 = vld [vmem:[#allocation10 + $0x1c] sm:$0xf]
        %v1864 = vld [vmem:[#allocation10 + $0x20] sm:$0xf]
        %v1865 = vld [vmem:[#allocation10 + $0x24] sm:$0xf]
        %v1866 = vld [vmem:[#allocation10 + $0x28] sm:$0xf]
        %v1867 = vld [vmem:[#allocation10 + $0x2c] sm:$0xf]
        %v1868 = vld [vmem:[#allocation10 + $0x30] sm:$0xf]
        %v1869 = vld [vmem:[#allocation10 + $0x34] sm:$0xf]
        %v1870 = vld [vmem:[#allocation10 + $0x38] sm:$0xf]
        %v1871 = vld [vmem:[#allocation10 + $0x3c] sm:$0xf]
        %v1872 = vld [vmem:[%s6] sm:$0x1]
        %v1874 = vlaneseq
        %v1875 = vshrl.u32 %v1874, 7
        %v1876 = vsub.s32 0, %v1875
        %v1877 = vrot.slane %v1872, %v1876
        %v1895 = vunpack.c.l.b16 %v1856
        %v1896 = vunpack.c.l.b16 %v1857
        %v1897 = vunpack.c.l.b16 %v1858
        %v1898 = vunpack.c.l.b16 %v1859
        %v1899 = vunpack.c.l.b16 %v1860
        %v1900 = vunpack.c.l.b16 %v1861
        %v1901 = vunpack.c.l.b16 %v1862
        %v1902 = vunpack.c.l.b16 %v1863
        %v1903 = vunpack.c.l.b16 %v1864
        %v1904 = vunpack.c.l.b16 %v1865
        %v1905 = vunpack.c.l.b16 %v1866
        %v1906 = vunpack.c.l.b16 %v1867
        %v1907 = vunpack.c.l.b16 %v1868
        %v1908 = vunpack.c.l.b16 %v1869
        %v1909 = vunpack.c.l.b16 %v1870
        %v1910 = vunpack.c.l.b16 %v1871
        %v1911 = vpack.c.b16 %v1896, %v1895
        %v1912 = vpack.c.b16 %v1898, %v1897
        %v1913 = vpack.c.b16 %v1900, %v1899
        %v1914 = vpack.c.b16 %v1902, %v1901
        %v1915 = vpack.c.b16 %v1904, %v1903
        %v1916 = vpack.c.b16 %v1906, %v1905
        %v1917 = vpack.c.b16 %v1908, %v1907
        %v1918 = vpack.c.b16 %v1910, %v1909
        %1927 = vmatprep.subr.bf16.mxu0 0
        %1928 = vmatpush1.bf16.msra.mxu0 %v1911
        %1929 = vmatprep.subr.bf16.mxu0 0
        %1930 = vmatpush1.bf16.msra.mxu0 %v1912
        %1931 = vmatprep.subr.bf16.mxu0 0
        %1932 = vmatpush1.bf16.msra.mxu0 %v1913
        %1933 = vmatprep.subr.bf16.mxu0 0
        %1934 = vmatpush1.bf16.msra.mxu0 %v1914
        %1935 = vmatprep.subr.bf16.mxu0 0
        %1936 = vmatpush1.bf16.msra.mxu0 %v1915
        %1937 = vmatprep.subr.bf16.mxu0 0
        %1938 = vmatpush1.bf16.msra.mxu0 %v1916
        %1939 = vmatprep.subr.bf16.mxu0 0
        %1940 = vmatpush1.bf16.msra.mxu0 %v1917
        %1941 = vmatprep.subr.bf16.mxu0 0
        %1942 = vmatpush1.bf16.msra.mxu0 %v1918
        %1943 = vmatprep.subr.bf16.mxu0 0
        %1944 = vmatpush1.bf16.msra.mxu0 0
        %1945 = vmatprep.subr.bf16.mxu0 0
        %1946 = vmatpush1.bf16.msra.mxu0 0
        %1947 = vmatprep.subr.bf16.mxu0 0
        %1948 = vmatpush1.bf16.msra.mxu0 0
        %1949 = vmatprep.subr.bf16.mxu0 0
        %1950 = vmatpush1.bf16.msra.mxu0 0
        %1951 = vmatprep.subr.bf16.mxu0 0
        %1952 = vmatpush1.bf16.msra.mxu0 0
        %1953 = vmatprep.subr.bf16.mxu0 0
        %1954 = vmatpush1.bf16.msra.mxu0 0
        %1955 = vmatprep.subr.bf16.mxu0 0
        %1956 = vmatpush1.bf16.msra.mxu0 0
        %1957 = vmatprep.subr.bf16.mxu0 0
        %1958 = vmatpush1.bf16.msra.mxu0 0
        %1959 = vmatprep.mubr.bf16.mxu0 0
        %1960 = vmatmul.mubr.bf16.gmra.mrb[0].mxu0 %v1852
        %v1961 = vpop.f32.mrb[0].mxu0
        %v1962 = vadd.f32 %v1877, %v1961
        %v1963 = vpop.f32.mrb[0].mxu0
        %v1964 = vpop.f32.mrb[0].mxu0
        %v1965 = vadd.f32 %v1877, %v1964
        %v1966 = vpop.f32.mrb[0].mxu0
        %1967 = vmatprep.mubr.bf16.mxu0 0
        %1968 = vmatmul.mubr.bf16.gmra.mrb[0].mxu0 %v1853
        %v1969 = vpop.f32.mrb[0].mxu0
        %v1970 = vadd.f32 %v1877, %v1969
        %v1971 = vpop.f32.mrb[0].mxu0
        %v1972 = vpop.f32.mrb[0].mxu0
        %v1973 = vadd.f32 %v1877, %v1972
        %v1974 = vpop.f32.mrb[0].mxu0
        %1975 = vmatprep.mubr.bf16.mxu0 0
        %1976 = vmatmul.mubr.bf16.gmra.mrb[0].mxu0 %v1854
        %v1977 = vpop.f32.mrb[0].mxu0
        %v1978 = vadd.f32 %v1877, %v1977
        %v1979 = vpop.f32.mrb[0].mxu0
        %v1980 = vpop.f32.mrb[0].mxu0
        %v1981 = vadd.f32 %v1877, %v1980
        %v1982 = vpop.f32.mrb[0].mxu0
        %1983 = vmatprep.mubr.bf16.mxu0 0
        %1984 = vmatmul.mubr.bf16.gmra.mrb[0].mxu0 %v1855
        %v1985 = vpop.f32.mrb[0].mxu0
        %v1986 = vadd.f32 %v1877, %v1985
        %v1987 = vpop.f32.mrb[0].mxu0
        %v1988 = vpop.f32.mrb[0].mxu0
        %v1989 = vadd.f32 %v1877, %v1988
        %v1990 = vpop.f32.mrb[0].mxu0
        %1991 = vdwg.mxu0
        %v1992 = vadd.f32 %v641, %v645
        %v1993 = vadd.f32 %v1992, %v651
        %v1994 = vadd.f32 %v1993, %v655
        %v1995 = vadd.f32 %v1994, %v661
        %v1996 = vadd.f32 %v1995, %v665
        %v1997 = vadd.f32 %v1996, %v671
        %v1998 = vadd.f32 %v1997, %v675
        %v1999 = vrot.slane %v1998, 4
        %v2000 = vadd.f32 %v1998, %v1999
        %v2001 = vrot.slane %v2000, 2
        %v2002 = vadd.f32 %v2000, %v2001
        %v2003 = vrot.slane %v2002, 1
        %v2004 = vadd.f32 %v2002, %v2003
        %2005 = vst [vmem:[%s442] sm:$0x1] %v2004
        %v2006 = vmul.f32 %v641, %v641
        %v2007 = vmul.f32 %v645, %v645
        %v2008 = vmul.f32 %v651, %v651
        %v2009 = vmul.f32 %v655, %v655
        %v2010 = vmul.f32 %v661, %v661
        %v2011 = vmul.f32 %v665, %v665
        %v2012 = vmul.f32 %v671, %v671
        %v2013 = vmul.f32 %v675, %v675
        %v2014 = vadd.f32 %v2006, %v2007
        %v2015 = vadd.f32 %v2014, %v2008
        %v2016 = vadd.f32 %v2015, %v2009
        %v2017 = vadd.f32 %v2016, %v2010
        %v2018 = vadd.f32 %v2017, %v2011
        %v2019 = vadd.f32 %v2018, %v2012
        %v2020 = vadd.f32 %v2019, %v2013
        %v2021 = vrot.slane %v2020, 4
        %v2022 = vadd.f32 %v2020, %v2021
        %v2023 = vrot.slane %v2022, 2
        %v2024 = vadd.f32 %v2022, %v2023
        %v2025 = vrot.slane %v2024, 1
        %v2026 = vadd.f32 %v2024, %v2025
        %2027 = vst [vmem:[%s442 + $0x1] sm:$0x1] %v2026
        %v2028 = vadd.f32 %v1962, %v1965
        %v2029 = vadd.f32 %v2028, %v1970
        %v2030 = vadd.f32 %v2029, %v1973
        %v2031 = vadd.f32 %v2030, %v1978
        %v2032 = vadd.f32 %v2031, %v1981
        %v2033 = vadd.f32 %v2032, %v1986
        %v2034 = vadd.f32 %v2033, %v1989
        %v2035 = vrot.slane %v2034, 4
        %v2036 = vadd.f32 %v2034, %v2035
        %v2037 = vrot.slane %v2036, 2
        %v2038 = vadd.f32 %v2036, %v2037
        %v2039 = vrot.slane %v2038, 1
        %v2040 = vadd.f32 %v2038, %v2039
        %2041 = vst [vmem:[%s442 + $0x2] sm:$0x1] %v2040
        %v2042 = vmul.f32 %v1962, %v1962
        %v2043 = vmul.f32 %v1965, %v1965
        %v2044 = vmul.f32 %v1970, %v1970
        %v2045 = vmul.f32 %v1973, %v1973
        %v2046 = vmul.f32 %v1978, %v1978
        %v2047 = vmul.f32 %v1981, %v1981
        %v2048 = vmul.f32 %v1986, %v1986
        %v2049 = vmul.f32 %v1989, %v1989
        %v2050 = vadd.f32 %v2042, %v2043
        %v2051 = vadd.f32 %v2050, %v2044
        %v2052 = vadd.f32 %v2051, %v2045
        %v2053 = vadd.f32 %v2052, %v2046
        %v2054 = vadd.f32 %v2053, %v2047
        %v2055 = vadd.f32 %v2054, %v2048
        %v2056 = vadd.f32 %v2055, %v2049
        %v2057 = vrot.slane %v2056, 4
        %v2058 = vadd.f32 %v2056, %v2057
        %v2059 = vrot.slane %v2058, 2
        %v2060 = vadd.f32 %v2058, %v2059
        %v2061 = vrot.slane %v2060, 1
        %v2062 = vadd.f32 %v2060, %v2061
        %2063 = vst [vmem:[%s442 + $0x3] sm:$0x1] %v2062
        %v2064 = vmul.f32 %v641, %v1962
        %v2065 = vmul.f32 %v645, %v1965
        %v2066 = vmul.f32 %v651, %v1970
        %v2067 = vmul.f32 %v655, %v1973
        %v2068 = vmul.f32 %v661, %v1978
        %v2069 = vmul.f32 %v665, %v1981
        %v2070 = vmul.f32 %v671, %v1986
        %v2071 = vmul.f32 %v675, %v1989
        %v2072 = vadd.f32 %v2064, %v2065
        %v2073 = vadd.f32 %v2072, %v2066
        %v2074 = vadd.f32 %v2073, %v2067
        %v2075 = vadd.f32 %v2074, %v2068
        %v2076 = vadd.f32 %v2075, %v2069
        %v2077 = vadd.f32 %v2076, %v2070
        %v2078 = vadd.f32 %v2077, %v2071
        %v2079 = vrot.slane %v2078, 4
        %v2080 = vadd.f32 %v2078, %v2079
        %v2081 = vrot.slane %v2080, 2
        %v2082 = vadd.f32 %v2080, %v2081
        %v2083 = vrot.slane %v2082, 1
        %v2084 = vadd.f32 %v2082, %v2083
        %2085 = vst [vmem:[%s442 + $0x4] sm:$0x1] %v2084
        %2086 = vst [vmem:[%s442 + $0x5] sm:$0x7] 0.0
        %v2087 = vpack.c.bf16 %v645, %v641
        %v2088 = vpack.c.bf16 %v655, %v651
        %v2089 = vpack.c.bf16 %v665, %v661
        %v2090 = vpack.c.bf16 %v675, %v671
        %v2095 = vunpack.c.l.b16 %v2087
        %v2096 = vunpack.c.h.b16 %v2087
        %v2097 = vunpack.c.l.b16 %v2088
        %v2098 = vunpack.c.h.b16 %v2088
        %v2099 = vunpack.c.l.b16 %v2089
        %v2100 = vunpack.c.h.b16 %v2089
        %v2101 = vunpack.c.l.b16 %v2090
        %v2102 = vunpack.c.h.b16 %v2090
        %v2103 = vpack.c.b16 %v2095, %v2095
        %v2104 = vpack.c.b16 %v2096, %v2096
        %v2105 = vpack.c.b16 %v2097, %v2097
        %v2106 = vpack.c.b16 %v2098, %v2098
        %v2107 = vpack.c.b16 %v2099, %v2099
        %v2108 = vpack.c.b16 %v2100, %v2100
        %v2109 = vpack.c.b16 %v2101, %v2101
        %v2110 = vpack.c.b16 %v2102, %v2102
        %2119 = vst [vmem:[%s428] sm:$0xf] %v2103
        %2120 = vst [vmem:[%s428 + $0x4] sm:$0xf] %v2104
        %2121 = vst [vmem:[%s428 + $0x8] sm:$0xf] %v2105
        %2122 = vst [vmem:[%s428 + $0xc] sm:$0xf] %v2106
        %2123 = vst [vmem:[%s428 + $0x10] sm:$0xf] %v2107
        %2124 = vst [vmem:[%s428 + $0x14] sm:$0xf] %v2108
        %2125 = vst [vmem:[%s428 + $0x18] sm:$0xf] %v2109
        %2126 = vst [vmem:[%s428 + $0x1c] sm:$0xf] %v2110
        %v2127 = vpack.c.bf16 %v1965, %v1962
        %v2128 = vpack.c.bf16 %v1973, %v1970
        %v2129 = vpack.c.bf16 %v1981, %v1978
        %v2130 = vpack.c.bf16 %v1989, %v1986
        %v2135 = vunpack.c.l.b16 %v2127
        %v2136 = vunpack.c.h.b16 %v2127
        %v2137 = vunpack.c.l.b16 %v2128
        %v2138 = vunpack.c.h.b16 %v2128
        %v2139 = vunpack.c.l.b16 %v2129
        %v2140 = vunpack.c.h.b16 %v2129
        %v2141 = vunpack.c.l.b16 %v2130
        %v2142 = vunpack.c.h.b16 %v2130
        %v2143 = vpack.c.b16 %v2135, %v2135
        %v2144 = vpack.c.b16 %v2136, %v2136
        %v2145 = vpack.c.b16 %v2137, %v2137
        %v2146 = vpack.c.b16 %v2138, %v2138
        %v2147 = vpack.c.b16 %v2139, %v2139
        %v2148 = vpack.c.b16 %v2140, %v2140
        %v2149 = vpack.c.b16 %v2141, %v2141
        %v2150 = vpack.c.b16 %v2142, %v2142
        %2159 = vst [vmem:[%s435] sm:$0xf] %v2143
        %2160 = vst [vmem:[%s435 + $0x4] sm:$0xf] %v2144
        %2161 = vst [vmem:[%s435 + $0x8] sm:$0xf] %v2145
        %2162 = vst [vmem:[%s435 + $0xc] sm:$0xf] %v2146
        %2163 = vst [vmem:[%s435 + $0x10] sm:$0xf] %v2147
        %2164 = vst [vmem:[%s435 + $0x14] sm:$0xf] %v2148
        %2165 = vst [vmem:[%s435 + $0x18] sm:$0xf] %v2149
        %2166 = vst [vmem:[%s435 + $0x1c] sm:$0xf] %v2150
        %s2167 = sand.u32 %s212, 1
        %s2168 = scalar_lea.sflag [#allocation6], %s2167
        %s2169 = sand.u32 %s212, 1
        %s2170 = smul.addr %s2169, 32
        %s2171 = scalar_lea.vmem [#allocation12], %s2170
        %s2172 = sand.u32 %s32, 1
        %s2173 = scalar_lea.sflag [#allocation14], %s2172
        %s2174 = sand.u32 %s242, 1
        %s2175 = smul.addr %s2174, 32
        %s2176 = scalar_lea.vmem [#allocation13], %s2175
        %s2177 = sand.u32 %s32, 1
        %s2178 = scalar_lea.sflag [#allocation14], %s2177
        %s2179 = sand.u32 %s272, 1
        %s2180 = smul.addr %s2179, 8
        %s2181 = scalar_lea.vmem [#allocation15], %s2180
        // Predicated region
        $region73: #{tpu_custom_call.1} parent=47 // pred_check
          %p2182 = pneg %p222
        $region74: #{tpu_custom_call.1} parent=47 // pred_check_branch
          %2184 = sbr.rel (%p2182) target = $region76
        $region75: #{tpu_custom_call.1} parent=47 // pred_region
          %s2185 = smul.u32 %s36, 4
          %s2186 = sadd.s32 %s2185, %s37
          %s2188 = ssub.s32 512, 512
          %2189 = vsyncadd %s2168, %s2188
          %s2190 = smul.addr %s2186, 8
          %s2191 = smul.addr %s2190, 64
          %s2192 = scalar_lea.hbm %s7, %s2191
          %s2193 = sshll.u32 %s2171, 4
          %s2194 = int_to_ptr.vmem [resolvable:$true] %s2193
          %2199 = dma.vmem_to_hbm [thread:$0]  %s2194, 512, %s2192, %s2168, 64, 64, 4
        $region76: #{tpu_custom_call.1} parent=47 // pred_fallthru
          _
        // Predicated region
        $region77: #{tpu_custom_call.1} parent=47 // pred_check
          %p2200 = pneg %p252
        $region78: #{tpu_custom_call.1} parent=47 // pred_check_branch
          %2202 = sbr.rel (%p2200) target = $region80
        $region79: #{tpu_custom_call.1} parent=47 // pred_region
          %s2203 = smul.u32 %s36, 4
          %s2204 = sadd.s32 %s2203, %s37
          %s2206 = ssub.s32 512, 512
          %2207 = vsyncadd %s2173, %s2206
          %s2208 = smul.addr %s2204, 8
          %s2209 = smul.addr %s2208, 64
          %s2210 = scalar_lea.hbm %s8, %s2209
          %s2211 = sshll.u32 %s2176, 4
          %s2212 = int_to_ptr.vmem [resolvable:$true] %s2211
          %2217 = dma.vmem_to_hbm [thread:$0]  %s2212, 512, %s2210, %s2173, 64, 64, 4
        $region80: #{tpu_custom_call.1} parent=47 // pred_fallthru
          _
        // Predicated region
        $region81: #{tpu_custom_call.1} parent=47 // pred_check
          %p2218 = pneg %p282
        $region82: #{tpu_custom_call.1} parent=47 // pred_check_branch
          %2220 = sbr.rel (%p2218) target = $region84
        $region83: #{tpu_custom_call.1} parent=47 // pred_region
          %s2221 = smul.u32 %s36, 4
          %s2222 = sadd.s32 %s2221, %s37
          %s2224 = ssub.s32 128, 128
          %2225 = vsyncadd %s2178, %s2224
          %s2226 = smul.addr %s2222, 128
          %s2227 = scalar_lea.hbm %s9, %s2226
          %s2229 = sshll.u32 %s2181, 4
          %s2230 = int_to_ptr.vmem [resolvable:$true] %s2229
          %2232 = dma.vmem_to_hbm [thread:$0]  %s2230, 128, %s2227, %s2178
        $region84: #{tpu_custom_call.1} parent=47 // pred_fallthru
          _
      $region48: #{tpu_custom_call.1} parent=5 // pred_fallthru
        _
      %p2233 = scmp.le.s32.totalorder 2, %s27
      // Predicated region
      $region85: #{tpu_custom_call.1} parent=5 // pred_check
        %p2234 = pneg %p2233
      $region86: #{tpu_custom_call.1} parent=5 // pred_check_branch
        %2236 = sbr.rel (%p2234) target = $region88
      $region87: #{tpu_custom_call.1} parent=5 // pred_region
        %s2237 = ssub.s32 %s27, 2
        // Predicated region
        $region89: #{tpu_custom_call.1} parent=87 // pred_check
          %p2238 = pneg %p228
        $region90: #{tpu_custom_call.1} parent=87 // pred_check_branch
          %2240 = sbr.rel (%p2238) target = $region92
        $region91: #{tpu_custom_call.1} parent=87 // pred_region
          %s2241 = sand.u32 %s213, 1
          %s2242 = scalar_lea.sflag [#allocation6], %s2241
          %s2243 = sand.u32 %s213, 1
          %s2244 = smul.addr %s2243, 32
          %s2245 = scalar_lea.vmem [#allocation12], %s2244
          %2246 = dma.done %s2242, 512
        $region92: #{tpu_custom_call.1} parent=87 // pred_fallthru
          _
        // Predicated region
        $region93: #{tpu_custom_call.1} parent=87 // pred_check
          %p2247 = pneg %p258
        $region94: #{tpu_custom_call.1} parent=87 // pred_check_branch
          %2249 = sbr.rel (%p2247) target = $region96
        $region95: #{tpu_custom_call.1} parent=87 // pred_region
          %s2250 = sand.u32 %s33, 1
          %s2251 = scalar_lea.sflag [#allocation14], %s2250
          %s2252 = sand.u32 %s243, 1
          %s2253 = smul.addr %s2252, 32
          %s2254 = scalar_lea.vmem [#allocation13], %s2253
          %2255 = dma.done %s2251, 512
        $region96: #{tpu_custom_call.1} parent=87 // pred_fallthru
          _
        // Predicated region
        $region97: #{tpu_custom_call.1} parent=87 // pred_check
          %p2256 = pneg %p288
        $region98: #{tpu_custom_call.1} parent=87 // pred_check_branch
          %2258 = sbr.rel (%p2256) target = $region100
        $region99: #{tpu_custom_call.1} parent=87 // pred_region
          %s2259 = sand.u32 %s33, 1
          %s2260 = scalar_lea.sflag [#allocation14], %s2259
          %s2261 = sand.u32 %s273, 1
          %s2262 = smul.addr %s2261, 8
          %s2263 = scalar_lea.vmem [#allocation15], %s2262
          %2264 = dma.done %s2260, 128
        $region100: #{tpu_custom_call.1} parent=87 // pred_fallthru
          _
      $region88: #{tpu_custom_call.1} parent=5 // pred_fallthru
        _
    $region6: #{tpu_custom_call.1} parent=1 // loop_footer
      %s31 = sadd.s32 1, %s27
    $region7: #{tpu_custom_call.1} parent=1 // loop_footer_branch
      %26 = sbr.rel target = $region3
    $region8: #{tpu_custom_call.1} parent=1 // loop_exit
      _
    %2265 = vsyncpa [#allocation5], 1
    %s2266 = scalar_lea.sflag [#allocation5], 1
    %2267 = vsyncpa %s2266, 1
    %2268 = vsyncpa [#allocation8], 1
    %2269 = vsyncpa [#allocation11], 1
    %2270 = vsyncpa [#allocation6], 1
    %s2271 = scalar_lea.sflag [#allocation6], 1
    %2272 = vsyncpa %s2271, 1
    %2273 = vsyncpa [#allocation14], 1
    %s2274 = scalar_lea.sflag [#allocation14], 1
    %2275 = vsyncpa %s2274, 1

</llo_original>
